<compile_context>
chip_gen: v7x
topology: tpu7x:2x2x1
jax: 0.10.0
libtpu: 0.0.40
codegen_flags: <defaults>
</compile_context>

<pallas_src>
import functools

import jax
import jax.numpy as jnp
from jax.experimental import pallas as pl
from jax.experimental.pallas import tpu as pltpu

_EPS = 1e-5                              # PyTorch BatchNorm2d default
_VMEM_LIMIT_BYTES = 32 * 1024 * 1024     # within scoped limits on all gens
_VMEM_BUDGET_BYTES = 20 * 1024 * 1024    # per-kernel working-set target
_MAX_TM = 512                            # row-tile sweet spot per review


def _round_up(x, m):
    return ((x + m - 1) // m) * m


# --------------------------------------------------------------------------
# Pallas kernels
# --------------------------------------------------------------------------
def _matmul_stats_kernel(p_ref, w_ref, y_ref, stats_ref, acc_ref):
    """Pass 1: y = patches @ w (bf16 -> f32 acc) + per-tile BN partial stats.

    p_ref:     (tm, tk)    bf16 im2col patch tile
    w_ref:     (tk, Cop)   bf16 weight tile
    y_ref:     (tm, Cop)   f32 raw conv output tile
    stats_ref: (1, 8, Cop) f32; row 0 = per-channel sum over this M tile,
                                row 1 = per-channel sum of squares.
    acc_ref:   (tm, Cop)   f32 VMEM accumulator (lives across the K axis).
    """
    k = pl.program_id(1)

    @pl.when(k == 0)
    def _():
        acc_ref[...] = jnp.zeros_like(acc_ref)

    acc_ref[...] += jnp.dot(p_ref[...], w_ref[...],
                            preferred_element_type=jnp.float32)

    @pl.when(k == pl.num_programs(1) - 1)
    def _():
        y = acc_ref[...]                                     # (tm, Cop) f32
        y_ref[...] = y
        row_sum = jnp.sum(y, axis=0, keepdims=True)          # (1, Cop)
        row_ssq = jnp.sum(y * y, axis=0, keepdims=True)      # (1, Cop)
        sub = jax.lax.broadcasted_iota(jnp.int32, (8, y.shape[1]), 0)
        stats_ref[0] = jnp.where(sub == 0, row_sum,
                                 jnp.where(sub == 1, row_ssq, 0.0))


def _bn_act_kernel(y_ref, scale_ref, shift_ref, o_ref, *, apply_relu):
    """Pass 2: out = y * scale + shift (f32 math), optional ReLU, cast."""
    out = y_ref[...] * scale_ref[...] + shift_ref[...]
    if apply_relu:
        out = jnp.maximum(out, 0.0)
    o_ref[...] = out.astype(o_ref.dtype)


# --------------------------------------------------------------------------
# Host-side helpers (plain JAX glue)
# --------------------------------------------------------------------------
def _pick_tiles(M, Kp, Cop):
    """Choose (tm, tk) under the VMEM budget; all sizes lane/sublane aligned."""
    tk = min(Kp, 512)
    while Kp % tk:
        tk -= 128
    # Roughly fixed: double-buffered bf16 weight tile + stats block.
    fixed = 2 * tk * Cop * 2 + 2 * 8 * Cop * 4
    # Per M row: 2x bf16 patch tile + 2x f32 y tile + f32 accumulator.
    per_row = 2 * tk * 2 + 2 * Cop * 4 + Cop * 4
    tm = (_VMEM_BUDGET_BYTES - fixed) // per_row
    tm = max(8, min(_MAX_TM, (tm // 8) * 8))
    tm = min(tm, _round_up(M, 8))
    return tm, tk


def _im2col_3x3(x_nhwc, stride=1):
    """3x3 patches, padding=1 (PyTorch conv3x3).  Per-row order: (kh, kw, c)."""
    N, H, W, C = x_nhwc.shape
    Ho = (H + 2 - 3) // stride + 1
    Wo = (W + 2 - 3) // stride + 1
    xp = jnp.pad(x_nhwc, ((0, 0), (1, 1), (1, 1), (0, 0)))
    taps = []
    for i in range(3):
        for j in range(3):
            taps.append(xp[:, i:i + (Ho - 1) * stride + 1:stride,
                              j:j + (Wo - 1) * stride + 1:stride, :])
    patches = jnp.stack(taps, axis=-2)               # (N, Ho, Wo, 9, C)
    return patches.reshape(N * Ho * Wo, 9 * C), (N, Ho, Wo)


def _w_to_mat(w):
    """PyTorch conv weight (Co, Ci, 3, 3) -> (9*Ci, Co) matching im2col order."""
    Co, Ci, kh, kw = w.shape
    return jnp.transpose(w, (2, 3, 1, 0)).reshape(kh * kw * Ci, Co)


def _conv_bn_layer(x_nhwc, w, gamma, beta, *, stride, apply_relu, out_dtype,
                   eps=_EPS):
    """conv3x3 -> BatchNorm2d (training batch stats) -> optional ReLU."""
    patches, (N, Ho, Wo) = _im2col_3x3(x_nhwc, stride=stride)
    M, K = patches.shape
    Co = w.shape[0]

    Kp = _round_up(K, 128)
    Cop = _round_up(Co, 128)                  # lane-dense output channels
    tm, tk = _pick_tiles(M, Kp, Cop)
    Mp = _round_up(M, tm)
    gm, gk = Mp // tm, Kp // tk

    p_pad = jnp.pad(patches.astype(jnp.bfloat16), ((0, Mp - M), (0, Kp - K)))
    w_pad = jnp.pad(_w_to_mat(w).astype(jnp.float32),
                    ((0, Kp - K), (0, Cop - Co))).astype(jnp.bfloat16)

    # ---- Pass 1: tiled matmul + partial BN statistics -------------------
    mm_cost = pl.CostEstimate(
        flops=2 * Mp * Kp * Cop,
        transcendentals=0,
        bytes_accessed=(Mp * Kp * 2 + gm * Kp * Cop * 2
                        + Mp * Cop * 4 + gm * 8 * Cop * 4))
    y, stats = pl.pallas_call(
        _matmul_stats_kernel,
        out_shape=(jax.ShapeDtypeStruct((Mp, Cop), jnp.float32),
                   jax.ShapeDtypeStruct((gm, 8, Cop), jnp.float32)),
        grid_spec=pltpu.PrefetchScalarGridSpec(
            num_scalar_prefetch=0,
            grid=(gm, gk),                                  # K axis last
            in_specs=[pl.BlockSpec((tm, tk), lambda i, k: (i, k)),
                      pl.BlockSpec((tk, Cop), lambda i, k: (k, 0))],
            out_specs=[pl.BlockSpec((tm, Cop), lambda i, k: (i, 0)),
                       pl.BlockSpec((1, 8, Cop), lambda i, k: (i, 0, 0))],
            scratch_shapes=[pltpu.VMEM((tm, Cop), jnp.float32)]),
        compiler_params=pltpu.CompilerParams(
            dimension_semantics=("parallel", "arbitrary"),
            vmem_limit_bytes=_VMEM_LIMIT_BYTES),
        cost_estimate=mm_cost,
    )(p_pad, w_pad)

    # ---- Per-channel scale/shift from exact full-M statistics (tiny) ----
    tot = jnp.sum(stats[:, 0, :], axis=0)
    tot2 = jnp.sum(stats[:, 1, :], axis=0)
    inv_m = 1.0 / float(M)                     # padded rows are zero => exact
    mean = tot * inv_m
    # TODO(synk): for very large M switch to a centered two-pass variance to
    # avoid E[x^2]-E[x]^2 cancellation; f32 is ample at these scales.
    var = jnp.maximum(tot2 * inv_m - mean * mean, 0.0)   # biased (training BN)
    inv_std = jax.lax.rsqrt(var + eps)
    g = jnp.pad(gamma.astype(jnp.float32).reshape(-1), (0, Cop - Co))
    b = jnp.pad(beta.astype(jnp.float32).reshape(-1), (0, Cop - Co))
    scale = (g * inv_std).reshape(1, Cop)
    shift = (b - mean * g * inv_std).reshape(1, Cop)

    # ---- Pass 2: tiled normalize + affine (+ ReLU) -----------------------
    out_itemsize = jnp.dtype(out_dtype).itemsize
    bn_cost = pl.CostEstimate(
        flops=2 * Mp * Cop,
        transcendentals=0,
        bytes_accessed=Mp * Cop * 4 + Mp * Cop * out_itemsize + 2 * Cop * 4)
    out = pl.pallas_call(
        functools.partial(_bn_act_kernel, apply_relu=apply_relu),
        out_shape=jax.ShapeDtypeStruct((Mp, Cop), out_dtype),
        grid_spec=pltpu.PrefetchScalarGridSpec(
            num_scalar_prefetch=0,
            grid=(gm,),
            in_specs=[pl.BlockSpec((tm, Cop), lambda i: (i, 0)),
                      pl.BlockSpec((1, Cop), lambda i: (0, 0)),
                      pl.BlockSpec((1, Cop), lambda i: (0, 0))],
            out_specs=pl.BlockSpec((tm, Cop), lambda i: (i, 0))),
        compiler_params=pltpu.CompilerParams(
            dimension_semantics=("parallel",),
            vmem_limit_bytes=_VMEM_LIMIT_BYTES),
        cost_estimate=bn_cost,
    )(y, scale, shift)

    return out[:M, :Co].reshape(N, Ho, Wo, Co)


def residual_block_forward(x_nchw, w1, g1, b1, w2, g2, b2, stride=1):
    """ResidualBlock forward (no downsample / no residual add, as in the ref)."""
    x = jnp.transpose(x_nchw, (0, 2, 3, 1)).astype(jnp.float32)   # NCHW->NHWC
    # conv1 (stride) + bn1 + relu; bf16 intermediate (it feeds a bf16 matmul
    # anyway, so this only halves the HBM round trip, no extra rounding).
    y1 = _conv_bn_layer(x, w1, g1, b1, stride=stride, apply_relu=True,
                        out_dtype=jnp.bfloat16)
    # conv2 (stride 1) + bn2; no relu, no residual add (matches PyTorch ref).
    # TODO(synk): fuse bn1+relu into conv2's matmul via in-kernel implicit
    # im2col (needs halo tiles to keep the zero spatial padding exact).
    y2 = _conv_bn_layer(y1, w2, g2, b2, stride=1, apply_relu=False,
                        out_dtype=jnp.float32)
    return jnp.transpose(y2, (0, 3, 1, 2))                        # NHWC->NCHW


# --------------------------------------------------------------------------
# Pure-JAX f32 reference for validation
# --------------------------------------------------------------------------
def _reference_forward(x, w1, g1, b1, w2, g2, b2, stride, eps=_EPS):
    def conv(v, w, s):
        return jax.lax.conv_general_dilated(
            v, w, window_strides=(s, s), padding=((1, 1), (1, 1)),
            dimension_numbers=("NCHW", "OIHW", "NCHW"))

    def bn(v, g, b):
        mean = v.mean(axis=(0, 2, 3), keepdims=True)
        var = v.var(axis=(0, 2, 3), keepdims=True)     # biased, training mode
        return ((v - mean) * jax.lax.rsqrt(var + eps) * g.reshape(1, -1, 1, 1)
                + b.reshape(1, -1, 1, 1))

    h = jnp.maximum(bn(conv(x, w1, stride), g1, b1), 0.0)
    return bn(conv(h, w2, 1), g2, b2)


if __name__ == "__main__":
    N, Cin, H, W = 2, 4, 16, 16
    Cout = 4
    stride = 1

    key = jax.random.PRNGKey(0)
    kx, kw1, kw2 = jax.random.split(key, 3)

    x = jax.random.normal(kx, (N, Cin, H, W), dtype=jnp.float32)
    w1 = jax.random.normal(kw1, (Cout, Cin, 3, 3), dtype=jnp.float32) * 0.1
    w2 = jax.random.normal(kw2, (Cout, Cout, 3, 3), dtype=jnp.float32) * 0.1
    # BatchNorm2d default affine init: gamma=1, beta=0 (training batch stats).
    g1 = jnp.ones((Cout,), jnp.float32)
    b1 = jnp.zeros((Cout,), jnp.float32)
    g2 = jnp.ones((Cout,), jnp.float32)
    b2 = jnp.zeros((Cout,), jnp.float32)

    fwd = jax.jit(residual_block_forward, static_argnames=("stride",))
    out = fwd(x, w1, g1, b1, w2, g2, b2, stride=stride)
    jax.block_until_ready(out)
    assert out.shape == (N, Cout, H // stride, W // stride)

    # Cross-check vs a pure-f32 JAX reference (bf16 MXU inputs -> loose tol).
    ref = _reference_forward(x, w1, g1, b1, w2, g2, b2, stride)
    err = float(jnp.max(jnp.abs(out - ref)))
    assert err < 0.25, f"max abs error vs reference too large: {err}"
    print("KERNEL_OK")
</pallas_src>

<mosaic_0001>
module attributes {stable_mosaic.version = 11 : i64} {
  func.func @_matmul_stats_kernel(%arg0: i32, %arg1: i32, %arg2: memref<512x128xbf16, #tpu.memory_space<vmem>>, %arg3: memref<128x128xbf16, #tpu.memory_space<vmem>>, %arg4: memref<512x128xf32, #tpu.memory_space<vmem>>, %arg5: memref<1x8x128xf32, #tpu.memory_space<vmem>>, %arg6: memref<512x128xf32, #tpu.memory_space<vmem>>) attributes {dimension_semantics = [#tpu.dimension_semantics<parallel>, #tpu.dimension_semantics<arbitrary>], iteration_bounds = array<i64: 1, 1>, scalar_prefetch = 0 : i64, scratch_operands = 1 : i64, tpu.core_type = #tpu.core_type<tc>, window_params = [{transform_indices = @transform_0, window_bounds = array<i64: 512, 128>}, {transform_indices = @transform_1, window_bounds = array<i64: 128, 128>}, {transform_indices = @transform_2, window_bounds = array<i64: 512, 128>}, {transform_indices = @transform_3, window_bounds = array<i64: 1, 8, 128>}]} {
    %c0_i32 = arith.constant 0 : i32
    %0 = arith.cmpi eq, %arg1, %c0_i32 : i32
    %1 = arith.extui %0 : i1 to i32
    %c0_i32_0 = arith.constant 0 : i32
    %2 = arith.cmpi ne, %1, %c0_i32_0 : i32
    scf.if %2 {
      %cst_10 = arith.constant 0.000000e+00 : f32
      %12 = vector.broadcast %cst_10 : f32 to vector<512x128xf32>
      %c0_11 = arith.constant 0 : index
      %c0_12 = arith.constant 0 : index
      %13 = vector.load %arg6[%c0_11, %c0_12] : memref<512x128xf32, #tpu.memory_space<vmem>>, vector<512x128xf32>
      tpu.vector_store %arg6[%c0_11, %c0_12], %12 {strides = array<i32>} : memref<512x128xf32, #tpu.memory_space<vmem>>, vector<512x128xf32>,
    } else {
    }
    %c0 = arith.constant 0 : index
    %c0_1 = arith.constant 0 : index
    %3 = vector.load %arg6[%c0, %c0_1] : memref<512x128xf32, #tpu.memory_space<vmem>>, vector<512x128xf32>
    %c0_2 = arith.constant 0 : index
    %c0_3 = arith.constant 0 : index
    %4 = vector.load %arg2[%c0_2, %c0_3] : memref<512x128xbf16, #tpu.memory_space<vmem>>, vector<512x128xbf16>
    %c0_4 = arith.constant 0 : index
    %c0_5 = arith.constant 0 : index
    %5 = vector.load %arg3[%c0_4, %c0_5] : memref<128x128xbf16, #tpu.memory_space<vmem>>, vector<128x128xbf16>
    %cst = arith.constant dense<0.000000e+00> : vector<512x128xf32>
    %6 = tpu.matmul %4, %5, %cst {dimension_numbers = #tpu.dot_dimension_numbers<[1], [0], [0], [1], [0, 0, 1, 1], [], []>} : vector<512x128xbf16>, vector<128x128xbf16>, vector<512x128xf32> -> vector<512x128xf32>
    %7 = arith.addf %3, %6 : vector<512x128xf32>
    %c0_6 = arith.constant 0 : index
    %c0_7 = arith.constant 0 : index
    %8 = vector.load %arg6[%c0_6, %c0_7] : memref<512x128xf32, #tpu.memory_space<vmem>>, vector<512x128xf32>
    tpu.vector_store %arg6[%c0_6, %c0_7], %7 {strides = array<i32>} : memref<512x128xf32, #tpu.memory_space<vmem>>, vector<512x128xf32>,
    %c0_i32_8 = arith.constant 0 : i32
    %9 = arith.cmpi eq, %arg1, %c0_i32_8 : i32
    %10 = arith.extui %9 : i1 to i32
    %c0_i32_9 = arith.constant 0 : i32
    %11 = arith.cmpi ne, %10, %c0_i32_9 : i32
    scf.if %11 {
      %c0_10 = arith.constant 0 : index
      %c0_11 = arith.constant 0 : index
      %12 = vector.load %arg6[%c0_10, %c0_11] : memref<512x128xf32, #tpu.memory_space<vmem>>, vector<512x128xf32>
      %c0_12 = arith.constant 0 : index
      %c0_13 = arith.constant 0 : index
      %13 = vector.load %arg4[%c0_12, %c0_13] : memref<512x128xf32, #tpu.memory_space<vmem>>, vector<512x128xf32>
      tpu.vector_store %arg4[%c0_12, %c0_13], %12 {strides = array<i32>} : memref<512x128xf32, #tpu.memory_space<vmem>>, vector<512x128xf32>,
      %cst_14 = arith.constant dense<0.000000e+00> : vector<128xf32>
      %14 = vector.multi_reduction <add>, %12, %cst_14 [0] : vector<512x128xf32> to vector<128xf32>
      %15 = vector.shape_cast %14 : vector<128xf32> to vector<1x128xf32>
      %16 = arith.mulf %12, %12 : vector<512x128xf32>
      %cst_15 = arith.constant dense<0.000000e+00> : vector<128xf32>
      %17 = vector.multi_reduction <add>, %16, %cst_15 [0] : vector<512x128xf32> to vector<128xf32>
      %18 = vector.shape_cast %17 : vector<128xf32> to vector<1x128xf32>
      %19 = tpu.iota {dimensions = array<i32: 0>} : vector<8x128xi32>
      %c0_i32_16 = arith.constant 0 : i32
      %20 = vector.broadcast %c0_i32_16 : i32 to vector<8x128xi32>
      %21 = arith.cmpi eq, %19, %20 : vector<8x128xi32>
      %c1_i32 = arith.constant 1 : i32
      %22 = vector.broadcast %c1_i32 : i32 to vector<8x128xi32>
      %23 = arith.cmpi eq, %19, %22 : vector<8x128xi32>
      %cst_17 = arith.constant 0.000000e+00 : f32
      %24 = vector.shape_cast %18 : vector<1x128xf32> to vector<1x128xf32>
      %25 = vector.broadcast %24 : vector<1x128xf32> to vector<8x128xf32>
      %26 = vector.broadcast %cst_17 : f32 to vector<8x128xf32>
      %27 = arith.select %23, %25, %26 : vector<8x128xi1>, vector<8x128xf32>
      %28 = vector.shape_cast %15 : vector<1x128xf32> to vector<1x128xf32>
      %29 = vector.broadcast %28 : vector<1x128xf32> to vector<8x128xf32>
      %30 = arith.select %21, %29, %27 : vector<8x128xi1>, vector<8x128xf32>
      %c0_18 = arith.constant 0 : index
      %c0_19 = arith.constant 0 : index
      %c0_20 = arith.constant 0 : index
      %31 = vector.load %arg5[%c0_18, %c0_19, %c0_20] : memref<1x8x128xf32, #tpu.memory_space<vmem>>, vector<1x8x128xf32>
      %32 = vector.shape_cast %31 : vector<1x8x128xf32> to vector<8x128xf32>
      %33 = vector.shape_cast %30 : vector<8x128xf32> to vector<1x8x128xf32>
      tpu.vector_store %arg5[%c0_18, %c0_19, %c0_20], %33 {strides = array<i32>} : memref<1x8x128xf32, #tpu.memory_space<vmem>>, vector<1x8x128xf32>,
    } else {
    }
    return
  }
  func.func @transform_0(%arg0: i32, %arg1: i32) -> (i32, i32) {
    %c0_i32 = arith.constant 0 : i32
    return %arg0, %arg1 : i32, i32
  }
  func.func @transform_1(%arg0: i32, %arg1: i32) -> (i32, i32) {
    %c0_i32 = arith.constant 0 : i32
    %c0_i32_0 = arith.constant 0 : i32
    return %arg1, %c0_i32 : i32, i32
  }
  func.func @transform_2(%arg0: i32, %arg1: i32) -> (i32, i32) {
    %c0_i32 = arith.constant 0 : i32
    %c0_i32_0 = arith.constant 0 : i32
    return %arg0, %c0_i32 : i32, i32
  }
  func.func @transform_3(%arg0: i32, %arg1: i32) -> (i32, i32, i32) {
    %c0_i32 = arith.constant 0 : i32
    %c0_i32_0 = arith.constant 0 : i32
    %c0_i32_1 = arith.constant 0 : i32
    return %arg0, %c0_i32, %c0_i32_0 : i32, i32, i32
  }
}

module attributes {stable_mosaic.version = 11 : i64} {
  func.func @_bn_act_kernel(%arg0: i32, %arg1: memref<512x128xf32, #tpu.memory_space<vmem>>, %arg2: memref<1x128xf32, #tpu.memory_space<vmem>>, %arg3: memref<1x128xf32, #tpu.memory_space<vmem>>, %arg4: memref<512x128xbf16, #tpu.memory_space<vmem>>) attributes {dimension_semantics = [#tpu.dimension_semantics<parallel>], iteration_bounds = array<i64: 1>, scalar_prefetch = 0 : i64, scratch_operands = 0 : i64, tpu.core_type = #tpu.core_type<tc>, window_params = [{transform_indices = @transform_0, window_bounds = array<i64: 512, 128>}, {pipeline_mode = #tpu.pipeline_mode<synchronous>, transform_indices = @transform_1, window_bounds = array<i64: 1, 128>}, {pipeline_mode = #tpu.pipeline_mode<synchronous>, transform_indices = @transform_2, window_bounds = array<i64: 1, 128>}, {transform_indices = @transform_3, window_bounds = array<i64: 512, 128>}]} {
    %c0 = arith.constant 0 : index
    %c0_0 = arith.constant 0 : index
    %0 = vector.load %arg1[%c0, %c0_0] : memref<512x128xf32, #tpu.memory_space<vmem>>, vector<512x128xf32>
    %c0_1 = arith.constant 0 : index
    %c0_2 = arith.constant 0 : index
    %1 = vector.load %arg2[%c0_1, %c0_2] : memref<1x128xf32, #tpu.memory_space<vmem>>, vector<1x128xf32>
    %2 = vector.broadcast %1 : vector<1x128xf32> to vector<512x128xf32>
    %3 = arith.mulf %0, %2 : vector<512x128xf32>
    %c0_3 = arith.constant 0 : index
    %c0_4 = arith.constant 0 : index
    %4 = vector.load %arg3[%c0_3, %c0_4] : memref<1x128xf32, #tpu.memory_space<vmem>>, vector<1x128xf32>
    %5 = vector.broadcast %4 : vector<1x128xf32> to vector<512x128xf32>
    %6 = arith.addf %3, %5 : vector<512x128xf32>
    %cst = arith.constant 0.000000e+00 : f32
    %7 = vector.broadcast %cst : f32 to vector<512x128xf32>
    %8 = arith.maximumf %6, %7 : vector<512x128xf32>
    %9 = arith.truncf %8 : vector<512x128xf32> to vector<512x128xbf16>
    %c0_5 = arith.constant 0 : index
    %c0_6 = arith.constant 0 : index
    %10 = vector.load %arg4[%c0_5, %c0_6] : memref<512x128xbf16, #tpu.memory_space<vmem>>, vector<512x128xbf16>
    tpu.vector_store %arg4[%c0_5, %c0_6], %9 {strides = array<i32>} : memref<512x128xbf16, #tpu.memory_space<vmem>>, vector<512x128xbf16>,
    return
  }
  func.func @transform_0(%arg0: i32) -> (i32, i32) {
    %c0_i32 = arith.constant 0 : i32
    %c0_i32_0 = arith.constant 0 : i32
    return %arg0, %c0_i32 : i32, i32
  }
  func.func @transform_1(%arg0: i32) -> (i32, i32) {
    %c0_i32 = arith.constant 0 : i32
    %c0_i32_0 = arith.constant 0 : i32
    %c0_i32_1 = arith.constant 0 : i32
    return %c0_i32, %c0_i32_0 : i32, i32
  }
  func.func @transform_2(%arg0: i32) -> (i32, i32) {
    %c0_i32 = arith.constant 0 : i32
    %c0_i32_0 = arith.constant 0 : i32
    %c0_i32_1 = arith.constant 0 : i32
    return %c0_i32, %c0_i32_0 : i32, i32
  }
  func.func @transform_3(%arg0: i32) -> (i32, i32) {
    %c0_i32 = arith.constant 0 : i32
    %c0_i32_0 = arith.constant 0 : i32
    return %arg0, %c0_i32 : i32, i32
  }
}

module attributes {stable_mosaic.version = 11 : i64} {
  func.func @_bn_act_kernel(%arg0: i32, %arg1: memref<512x128xf32, #tpu.memory_space<vmem>>, %arg2: memref<1x128xf32, #tpu.memory_space<vmem>>, %arg3: memref<1x128xf32, #tpu.memory_space<vmem>>, %arg4: memref<512x128xf32, #tpu.memory_space<vmem>>) attributes {dimension_semantics = [#tpu.dimension_semantics<parallel>], iteration_bounds = array<i64: 1>, scalar_prefetch = 0 : i64, scratch_operands = 0 : i64, tpu.core_type = #tpu.core_type<tc>, window_params = [{transform_indices = @transform_0, window_bounds = array<i64: 512, 128>}, {pipeline_mode = #tpu.pipeline_mode<synchronous>, transform_indices = @transform_1, window_bounds = array<i64: 1, 128>}, {pipeline_mode = #tpu.pipeline_mode<synchronous>, transform_indices = @transform_2, window_bounds = array<i64: 1, 128>}, {transform_indices = @transform_3, window_bounds = array<i64: 512, 128>}]} {
    %c0 = arith.constant 0 : index
    %c0_0 = arith.constant 0 : index
    %0 = vector.load %arg1[%c0, %c0_0] : memref<512x128xf32, #tpu.memory_space<vmem>>, vector<512x128xf32>
    %c0_1 = arith.constant 0 : index
    %c0_2 = arith.constant 0 : index
    %1 = vector.load %arg2[%c0_1, %c0_2] : memref<1x128xf32, #tpu.memory_space<vmem>>, vector<1x128xf32>
    %2 = vector.broadcast %1 : vector<1x128xf32> to vector<512x128xf32>
    %3 = arith.mulf %0, %2 : vector<512x128xf32>
    %c0_3 = arith.constant 0 : index
    %c0_4 = arith.constant 0 : index
    %4 = vector.load %arg3[%c0_3, %c0_4] : memref<1x128xf32, #tpu.memory_space<vmem>>, vector<1x128xf32>
    %5 = vector.broadcast %4 : vector<1x128xf32> to vector<512x128xf32>
    %6 = arith.addf %3, %5 : vector<512x128xf32>
    %c0_5 = arith.constant 0 : index
    %c0_6 = arith.constant 0 : index
    %7 = vector.load %arg4[%c0_5, %c0_6] : memref<512x128xf32, #tpu.memory_space<vmem>>, vector<512x128xf32>
    tpu.vector_store %arg4[%c0_5, %c0_6], %6 {strides = array<i32>} : memref<512x128xf32, #tpu.memory_space<vmem>>, vector<512x128xf32>,
    return
  }
  func.func @transform_0(%arg0: i32) -> (i32, i32) {
    %c0_i32 = arith.constant 0 : i32
    %c0_i32_0 = arith.constant 0 : i32
    return %arg0, %c0_i32 : i32, i32
  }
  func.func @transform_1(%arg0: i32) -> (i32, i32) {
    %c0_i32 = arith.constant 0 : i32
    %c0_i32_0 = arith.constant 0 : i32
    %c0_i32_1 = arith.constant 0 : i32
    return %c0_i32, %c0_i32_0 : i32, i32
  }
  func.func @transform_2(%arg0: i32) -> (i32, i32) {
    %c0_i32 = arith.constant 0 : i32
    %c0_i32_0 = arith.constant 0 : i32
    %c0_i32_1 = arith.constant 0 : i32
    return %c0_i32, %c0_i32_0 : i32, i32
  }
  func.func @transform_3(%arg0: i32) -> (i32, i32) {
    %c0_i32 = arith.constant 0 : i32
    %c0_i32_0 = arith.constant 0 : i32
    return %arg0, %c0_i32 : i32, i32
  }
}

</mosaic_0001>

<llo_original>
// kernel: residual_block_forward.5
$region0: #{residual_block_forward.5}
  #allocation0 [shape = 'u32[]', space=smem, size = 0x4, offset = 0x4, fixed_abs, tag = 'smem constant byte address 0x4 - core index']
  #allocation1 [shape = 'u32[144,128]{1,0:T(1,128)}', space=vmem, size = 0x12000, scoped, tag = 'internal scratch']
  %s0 = inlined_call_operand.vmem [shape: f32[512,128], index: 0, kind: input, shape index: {}]
  %s1 = inlined_call_operand.vmem [shape: f32[1,128], index: 1, kind: input, shape index: {}]
  %s2 = inlined_call_operand.vmem [shape: f32[1,128], index: 2, kind: input, shape index: {}]
  %s3 = inlined_call_operand.vmem [shape: bf16[512,128], index: 3, kind: output, shape index: {}]
  %s4 = sld [smem:[#allocation0]]
  $region22: #{residual_block_forward.5} parent=0
    _
  %s6 = ssub.s32 1, %s4
  %s7 = scalar_select 0, %s6, %s4
  // Predicated region
  $region2: #{residual_block_forward.5} parent=0 // pred_check
    _
  $region3: #{residual_block_forward.5} parent=0 // pred_check_branch
    %9 = sbr.rel (0) target = $region5
  $region4: #{residual_block_forward.5} parent=0 // pred_region
    _
  $region5: #{residual_block_forward.5} parent=0 // pred_fallthru
    _
  // Predicated region
  $region6: #{residual_block_forward.5} parent=0 // pred_check
    _
  $region7: #{residual_block_forward.5} parent=0 // pred_check_branch
    %11 = sbr.rel (0) target = $region9
  $region8: #{residual_block_forward.5} parent=0 // pred_region
    _
  $region9: #{residual_block_forward.5} parent=0 // pred_fallthru
    _
  // Predicated region
  $region10: #{residual_block_forward.5} parent=0 // pred_check
    _
  $region11: #{residual_block_forward.5} parent=0 // pred_check_branch
    %13 = sbr.rel (0) target = $region13
  $region12: #{residual_block_forward.5} parent=0 // pred_region
    _
  $region13: #{residual_block_forward.5} parent=0 // pred_fallthru
    _
  %v14 = vld [vmem:[%s0] sm:$0xff]
  %v15 = vld [vmem:[%s0 + $0x8] sm:$0xff]
  %v16 = vld [vmem:[%s0 + $0x10] sm:$0xff]
  %v17 = vld [vmem:[%s0 + $0x18] sm:$0xff]
  %v18 = vld [vmem:[%s0 + $0x20] sm:$0xff]
  %v19 = vld [vmem:[%s0 + $0x28] sm:$0xff]
  %v20 = vld [vmem:[%s0 + $0x30] sm:$0xff]
  %v21 = vld [vmem:[%s0 + $0x38] sm:$0xff]
  %v22 = vld [vmem:[%s0 + $0x40] sm:$0xff]
  %v23 = vld [vmem:[%s0 + $0x48] sm:$0xff]
  %v24 = vld [vmem:[%s0 + $0x50] sm:$0xff]
  %v25 = vld [vmem:[%s0 + $0x58] sm:$0xff]
  %v26 = vld [vmem:[%s0 + $0x60] sm:$0xff]
  %v27 = vld [vmem:[%s0 + $0x68] sm:$0xff]
  %v28 = vld [vmem:[%s0 + $0x70] sm:$0xff]
  %v29 = vld [vmem:[%s0 + $0x78] sm:$0xff]
  %v30 = vld [vmem:[%s0 + $0x80] sm:$0xff]
  %v31 = vld [vmem:[%s0 + $0x88] sm:$0xff]
  %v32 = vld [vmem:[%s0 + $0x90] sm:$0xff]
  %v33 = vld [vmem:[%s0 + $0x98] sm:$0xff]
  %v34 = vld [vmem:[%s0 + $0xa0] sm:$0xff]
  %v35 = vld [vmem:[%s0 + $0xa8] sm:$0xff]
  %v36 = vld [vmem:[%s0 + $0xb0] sm:$0xff]
  %v37 = vld [vmem:[%s0 + $0xb8] sm:$0xff]
  %v38 = vld [vmem:[%s0 + $0xc0] sm:$0xff]
  %v39 = vld [vmem:[%s0 + $0xc8] sm:$0xff]
  %v40 = vld [vmem:[%s0 + $0xd0] sm:$0xff]
  %v41 = vld [vmem:[%s0 + $0xd8] sm:$0xff]
  %v42 = vld [vmem:[%s0 + $0xe0] sm:$0xff]
  %v43 = vld [vmem:[%s0 + $0xe8] sm:$0xff]
  %v44 = vld [vmem:[%s0 + $0xf0] sm:$0xff]
  %v45 = vld [vmem:[%s0 + $0xf8] sm:$0xff]
  %v46 = vld [vmem:[%s0 + $0x100] sm:$0xff]
  %v47 = vld [vmem:[%s0 + $0x108] sm:$0xff]
  %v48 = vld [vmem:[%s0 + $0x110] sm:$0xff]
  %v49 = vld [vmem:[%s0 + $0x118] sm:$0xff]
  %v50 = vld [vmem:[%s0 + $0x120] sm:$0xff]
  %v51 = vld [vmem:[%s0 + $0x128] sm:$0xff]
  %v52 = vld [vmem:[%s0 + $0x130] sm:$0xff]
  %v53 = vld [vmem:[%s0 + $0x138] sm:$0xff]
  %v54 = vld [vmem:[%s0 + $0x140] sm:$0xff]
  %v55 = vld [vmem:[%s0 + $0x148] sm:$0xff]
  %v56 = vld [vmem:[%s0 + $0x150] sm:$0xff]
  %v57 = vld [vmem:[%s0 + $0x158] sm:$0xff]
  %v58 = vld [vmem:[%s0 + $0x160] sm:$0xff]
  %v59 = vld [vmem:[%s0 + $0x168] sm:$0xff]
  %v60 = vld [vmem:[%s0 + $0x170] sm:$0xff]
  %v61 = vld [vmem:[%s0 + $0x178] sm:$0xff]
  %v62 = vld [vmem:[%s0 + $0x180] sm:$0xff]
  %v63 = vld [vmem:[%s0 + $0x188] sm:$0xff]
  %v64 = vld [vmem:[%s0 + $0x190] sm:$0xff]
  %v65 = vld [vmem:[%s0 + $0x198] sm:$0xff]
  %v66 = vld [vmem:[%s0 + $0x1a0] sm:$0xff]
  %v67 = vld [vmem:[%s0 + $0x1a8] sm:$0xff]
  %v68 = vld [vmem:[%s0 + $0x1b0] sm:$0xff]
  %v69 = vld [vmem:[%s0 + $0x1b8] sm:$0xff]
  %v70 = vld [vmem:[%s0 + $0x1c0] sm:$0xff]
  %v71 = vld [vmem:[%s0 + $0x1c8] sm:$0xff]
  %v72 = vld [vmem:[%s0 + $0x1d0] sm:$0xff]
  %v73 = vld [vmem:[%s0 + $0x1d8] sm:$0xff]
  %v74 = vld [vmem:[%s0 + $0x1e0] sm:$0xff]
  %v75 = vld [vmem:[%s0 + $0x1e8] sm:$0xff]
  %v76 = vld [vmem:[%s0 + $0x1f0] sm:$0xff]
  %v77 = vld [vmem:[%s0 + $0x1f8] sm:$0xff]
  %v78 = vld [vmem:[%s1] sm:$0x1]
  %v80 = vlaneseq
  %v81 = vshrl.u32 %v80, 7
  %v82 = vsub.s32 0, %v81
  %v83 = vrot.slane %v78, %v82
  %v85 = vmul.f32 %v14, %v83
  %v86 = vmul.f32 %v15, %v83
  %v87 = vmul.f32 %v16, %v83
  %v88 = vmul.f32 %v17, %v83
  %v89 = vmul.f32 %v18, %v83
  %v90 = vmul.f32 %v19, %v83
  %v91 = vmul.f32 %v20, %v83
  %v92 = vmul.f32 %v21, %v83
  %v93 = vmul.f32 %v22, %v83
  %v94 = vmul.f32 %v23, %v83
  %v95 = vmul.f32 %v24, %v83
  %v96 = vmul.f32 %v25, %v83
  %v97 = vmul.f32 %v26, %v83
  %v98 = vmul.f32 %v27, %v83
  %v99 = vmul.f32 %v28, %v83
  %v100 = vmul.f32 %v29, %v83
  %v101 = vmul.f32 %v30, %v83
  %v102 = vmul.f32 %v31, %v83
  %v103 = vmul.f32 %v32, %v83
  %v104 = vmul.f32 %v33, %v83
  %v105 = vmul.f32 %v34, %v83
  %v106 = vmul.f32 %v35, %v83
  %v107 = vmul.f32 %v36, %v83
  %v108 = vmul.f32 %v37, %v83
  %v109 = vmul.f32 %v38, %v83
  %v110 = vmul.f32 %v39, %v83
  %v111 = vmul.f32 %v40, %v83
  %v112 = vmul.f32 %v41, %v83
  %v113 = vmul.f32 %v42, %v83
  %v114 = vmul.f32 %v43, %v83
  %v115 = vmul.f32 %v44, %v83
  %v116 = vmul.f32 %v45, %v83
  %v117 = vmul.f32 %v46, %v83
  %v118 = vmul.f32 %v47, %v83
  %v119 = vmul.f32 %v48, %v83
  %v120 = vmul.f32 %v49, %v83
  %v121 = vmul.f32 %v50, %v83
  %v122 = vmul.f32 %v51, %v83
  %v123 = vmul.f32 %v52, %v83
  %v124 = vmul.f32 %v53, %v83
  %v125 = vmul.f32 %v54, %v83
  %v126 = vmul.f32 %v55, %v83
  %v127 = vmul.f32 %v56, %v83
  %v128 = vmul.f32 %v57, %v83
  %v129 = vmul.f32 %v58, %v83
  %v130 = vmul.f32 %v59, %v83
  %v131 = vmul.f32 %v60, %v83
  %v132 = vmul.f32 %v61, %v83
  %v133 = vmul.f32 %v62, %v83
  %v134 = vmul.f32 %v63, %v83
  %v135 = vmul.f32 %v64, %v83
  %v136 = vmul.f32 %v65, %v83
  %v137 = vmul.f32 %v66, %v83
  %v138 = vmul.f32 %v67, %v83
  %v139 = vmul.f32 %v68, %v83
  %v140 = vmul.f32 %v69, %v83
  %v141 = vmul.f32 %v70, %v83
  %v142 = vmul.f32 %v71, %v83
  %v143 = vmul.f32 %v72, %v83
  %v144 = vmul.f32 %v73, %v83
  %v145 = vmul.f32 %v74, %v83
  %v146 = vmul.f32 %v75, %v83
  %v147 = vmul.f32 %v76, %v83
  %v148 = vmul.f32 %v77, %v83
  %v149 = vld [vmem:[%s2] sm:$0x1]
  %v151 = vlaneseq
  %v152 = vshrl.u32 %v151, 7
  %v153 = vsub.s32 0, %v152
  %v154 = vrot.slane %v149, %v153
  %v156 = vadd.f32 %v85, %v154
  %v157 = vadd.f32 %v86, %v154
  %v158 = vadd.f32 %v87, %v154
  %v159 = vadd.f32 %v88, %v154
  %v160 = vadd.f32 %v89, %v154
  %v161 = vadd.f32 %v90, %v154
  %v162 = vadd.f32 %v91, %v154
  %v163 = vadd.f32 %v92, %v154
  %v164 = vadd.f32 %v93, %v154
  %v165 = vadd.f32 %v94, %v154
  %v166 = vadd.f32 %v95, %v154
  %v167 = vadd.f32 %v96, %v154
  %v168 = vadd.f32 %v97, %v154
  %v169 = vadd.f32 %v98, %v154
  %v170 = vadd.f32 %v99, %v154
  %v171 = vadd.f32 %v100, %v154
  %v172 = vadd.f32 %v101, %v154
  %v173 = vadd.f32 %v102, %v154
  %v174 = vadd.f32 %v103, %v154
  %v175 = vadd.f32 %v104, %v154
  %v176 = vadd.f32 %v105, %v154
  %v177 = vadd.f32 %v106, %v154
  %v178 = vadd.f32 %v107, %v154
  %v179 = vadd.f32 %v108, %v154
  %v180 = vadd.f32 %v109, %v154
  %v181 = vadd.f32 %v110, %v154
  %v182 = vadd.f32 %v111, %v154
  %v183 = vadd.f32 %v112, %v154
  %v184 = vadd.f32 %v113, %v154
  %v185 = vadd.f32 %v114, %v154
  %v186 = vadd.f32 %v115, %v154
  %v187 = vadd.f32 %v116, %v154
  %v188 = vadd.f32 %v117, %v154
  %v189 = vadd.f32 %v118, %v154
  %v190 = vadd.f32 %v119, %v154
  %v191 = vadd.f32 %v120, %v154
  %v192 = vadd.f32 %v121, %v154
  %v193 = vadd.f32 %v122, %v154
  %v194 = vadd.f32 %v123, %v154
  %v195 = vadd.f32 %v124, %v154
  %v196 = vadd.f32 %v125, %v154
  %v197 = vadd.f32 %v126, %v154
  %v198 = vadd.f32 %v127, %v154
  %v199 = vadd.f32 %v128, %v154
  %v200 = vadd.f32 %v129, %v154
  %v201 = vadd.f32 %v130, %v154
  %v202 = vadd.f32 %v131, %v154
  %v203 = vadd.f32 %v132, %v154
  %v204 = vadd.f32 %v133, %v154
  %v205 = vadd.f32 %v134, %v154
  %v206 = vadd.f32 %v135, %v154
  %v207 = vadd.f32 %v136, %v154
  %v208 = vadd.f32 %v137, %v154
  %v209 = vadd.f32 %v138, %v154
  %v210 = vadd.f32 %v139, %v154
  %v211 = vadd.f32 %v140, %v154
  %v212 = vadd.f32 %v141, %v154
  %v213 = vadd.f32 %v142, %v154
  %v214 = vadd.f32 %v143, %v154
  %v215 = vadd.f32 %v144, %v154
  %v216 = vadd.f32 %v145, %v154
  %v217 = vadd.f32 %v146, %v154
  %v218 = vadd.f32 %v147, %v154
  %v219 = vadd.f32 %v148, %v154
  %v220 = vmax.f32 %v156, 0.0
  %v221 = vmax.f32 %v157, 0.0
  %v222 = vmax.f32 %v158, 0.0
  %v223 = vmax.f32 %v159, 0.0
  %v224 = vmax.f32 %v160, 0.0
  %v225 = vmax.f32 %v161, 0.0
  %v226 = vmax.f32 %v162, 0.0
  %v227 = vmax.f32 %v163, 0.0
  %v228 = vmax.f32 %v164, 0.0
  %v229 = vmax.f32 %v165, 0.0
  %v230 = vmax.f32 %v166, 0.0
  %v231 = vmax.f32 %v167, 0.0
  %v232 = vmax.f32 %v168, 0.0
  %v233 = vmax.f32 %v169, 0.0
  %v234 = vmax.f32 %v170, 0.0
  %v235 = vmax.f32 %v171, 0.0
  %v236 = vmax.f32 %v172, 0.0
  %v237 = vmax.f32 %v173, 0.0
  %v238 = vmax.f32 %v174, 0.0
  %v239 = vmax.f32 %v175, 0.0
  %v240 = vmax.f32 %v176, 0.0
  %v241 = vmax.f32 %v177, 0.0
  %v242 = vmax.f32 %v178, 0.0
  %v243 = vmax.f32 %v179, 0.0
  %v244 = vmax.f32 %v180, 0.0
  %v245 = vmax.f32 %v181, 0.0
  %v246 = vmax.f32 %v182, 0.0
  %v247 = vmax.f32 %v183, 0.0
  %v248 = vmax.f32 %v184, 0.0
  %v249 = vmax.f32 %v185, 0.0
  %v250 = vmax.f32 %v186, 0.0
  %v251 = vmax.f32 %v187, 0.0
  %v252 = vmax.f32 %v188, 0.0
  %v253 = vmax.f32 %v189, 0.0
  %v254 = vmax.f32 %v190, 0.0
  %v255 = vmax.f32 %v191, 0.0
  %v256 = vmax.f32 %v192, 0.0
  %v257 = vmax.f32 %v193, 0.0
  %v258 = vmax.f32 %v194, 0.0
  %v259 = vmax.f32 %v195, 0.0
  %v260 = vmax.f32 %v196, 0.0
  %v261 = vmax.f32 %v197, 0.0
  %v262 = vmax.f32 %v198, 0.0
  %v263 = vmax.f32 %v199, 0.0
  %v264 = vmax.f32 %v200, 0.0
  %v265 = vmax.f32 %v201, 0.0
  %v266 = vmax.f32 %v202, 0.0
  %v267 = vmax.f32 %v203, 0.0
  %v268 = vmax.f32 %v204, 0.0
  %v269 = vmax.f32 %v205, 0.0
  %v270 = vmax.f32 %v206, 0.0
  %v271 = vmax.f32 %v207, 0.0
  %v272 = vmax.f32 %v208, 0.0
  %v273 = vmax.f32 %v209, 0.0
  %v274 = vmax.f32 %v210, 0.0
  %v275 = vmax.f32 %v211, 0.0
  %v276 = vmax.f32 %v212, 0.0
  %v277 = vmax.f32 %v213, 0.0
  %v278 = vmax.f32 %v214, 0.0
  %v279 = vmax.f32 %v215, 0.0
  %v280 = vmax.f32 %v216, 0.0
  %v281 = vmax.f32 %v217, 0.0
  %v282 = vmax.f32 %v218, 0.0
  %v283 = vmax.f32 %v219, 0.0
  %v284 = vpack.c.bf16 %v221, %v220
  %v285 = vpack.c.bf16 %v223, %v222
  %v286 = vpack.c.bf16 %v225, %v224
  %v287 = vpack.c.bf16 %v227, %v226
  %v288 = vpack.c.bf16 %v229, %v228
  %v289 = vpack.c.bf16 %v231, %v230
  %v290 = vpack.c.bf16 %v233, %v232
  %v291 = vpack.c.bf16 %v235, %v234
  %v292 = vpack.c.bf16 %v237, %v236
  %v293 = vpack.c.bf16 %v239, %v238
  %v294 = vpack.c.bf16 %v241, %v240
  %v295 = vpack.c.bf16 %v243, %v242
  %v296 = vpack.c.bf16 %v245, %v244
  %v297 = vpack.c.bf16 %v247, %v246
  %v298 = vpack.c.bf16 %v249, %v248
  %v299 = vpack.c.bf16 %v251, %v250
  %v300 = vpack.c.bf16 %v253, %v252
  %v301 = vpack.c.bf16 %v255, %v254
  %v302 = vpack.c.bf16 %v257, %v256
  %v303 = vpack.c.bf16 %v259, %v258
  %v304 = vpack.c.bf16 %v261, %v260
  %v305 = vpack.c.bf16 %v263, %v262
  %v306 = vpack.c.bf16 %v265, %v264
  %v307 = vpack.c.bf16 %v267, %v266
  %v308 = vpack.c.bf16 %v269, %v268
  %v309 = vpack.c.bf16 %v271, %v270
  %v310 = vpack.c.bf16 %v273, %v272
  %v311 = vpack.c.bf16 %v275, %v274
  %v312 = vpack.c.bf16 %v277, %v276
  %v313 = vpack.c.bf16 %v279, %v278
  %v314 = vpack.c.bf16 %v281, %v280
  %v315 = vpack.c.bf16 %v283, %v282
  %v348 = vunpack.c.l.b16 %v284
  %v349 = vunpack.c.h.b16 %v284
  %v350 = vunpack.c.l.b16 %v285
  %v351 = vunpack.c.h.b16 %v285
  %v352 = vunpack.c.l.b16 %v286
  %v353 = vunpack.c.h.b16 %v286
  %v354 = vunpack.c.l.b16 %v287
  %v355 = vunpack.c.h.b16 %v287
  %v356 = vunpack.c.l.b16 %v288
  %v357 = vunpack.c.h.b16 %v288
  %v358 = vunpack.c.l.b16 %v289
  %v359 = vunpack.c.h.b16 %v289
  %v360 = vunpack.c.l.b16 %v290
  %v361 = vunpack.c.h.b16 %v290
  %v362 = vunpack.c.l.b16 %v291
  %v363 = vunpack.c.h.b16 %v291
  %v364 = vunpack.c.l.b16 %v292
  %v365 = vunpack.c.h.b16 %v292
  %v366 = vunpack.c.l.b16 %v293
  %v367 = vunpack.c.h.b16 %v293
  %v368 = vunpack.c.l.b16 %v294
  %v369 = vunpack.c.h.b16 %v294
  %v370 = vunpack.c.l.b16 %v295
  %v371 = vunpack.c.h.b16 %v295
  %v372 = vunpack.c.l.b16 %v296
  %v373 = vunpack.c.h.b16 %v296
  %v374 = vunpack.c.l.b16 %v297
  %v375 = vunpack.c.h.b16 %v297
  %v376 = vunpack.c.l.b16 %v298
  %v377 = vunpack.c.h.b16 %v298
  %v378 = vunpack.c.l.b16 %v299
  %v379 = vunpack.c.h.b16 %v299
  %v380 = vunpack.c.l.b16 %v300
  %v381 = vunpack.c.h.b16 %v300
  %v382 = vunpack.c.l.b16 %v301
  %v383 = vunpack.c.h.b16 %v301
  %v384 = vunpack.c.l.b16 %v302
  %v385 = vunpack.c.h.b16 %v302
  %v386 = vunpack.c.l.b16 %v303
  %v387 = vunpack.c.h.b16 %v303
  %v388 = vunpack.c.l.b16 %v304
  %v389 = vunpack.c.h.b16 %v304
  %v390 = vunpack.c.l.b16 %v305
  %v391 = vunpack.c.h.b16 %v305
  %v392 = vunpack.c.l.b16 %v306
  %v393 = vunpack.c.h.b16 %v306
  %v394 = vunpack.c.l.b16 %v307
  %v395 = vunpack.c.h.b16 %v307
  %v396 = vunpack.c.l.b16 %v308
  %v397 = vunpack.c.h.b16 %v308
  %v398 = vunpack.c.l.b16 %v309
  %v399 = vunpack.c.h.b16 %v309
  %v400 = vunpack.c.l.b16 %v310
  %v401 = vunpack.c.h.b16 %v310
  %v402 = vunpack.c.l.b16 %v311
  %v403 = vunpack.c.h.b16 %v311
  %v404 = vunpack.c.l.b16 %v312
  %v405 = vunpack.c.h.b16 %v312
  %v406 = vunpack.c.l.b16 %v313
  %v407 = vunpack.c.h.b16 %v313
  %v408 = vunpack.c.l.b16 %v314
  %v409 = vunpack.c.h.b16 %v314
  %v410 = vunpack.c.l.b16 %v315
  %v411 = vunpack.c.h.b16 %v315
  %v412 = vpack.c.b16 %v348, %v348
  %v413 = vpack.c.b16 %v349, %v349
  %v414 = vpack.c.b16 %v350, %v350
  %v415 = vpack.c.b16 %v351, %v351
  %v416 = vpack.c.b16 %v352, %v352
  %v417 = vpack.c.b16 %v353, %v353
  %v418 = vpack.c.b16 %v354, %v354
  %v419 = vpack.c.b16 %v355, %v355
  %v420 = vpack.c.b16 %v356, %v356
  %v421 = vpack.c.b16 %v357, %v357
  %v422 = vpack.c.b16 %v358, %v358
  %v423 = vpack.c.b16 %v359, %v359
  %v424 = vpack.c.b16 %v360, %v360
  %v425 = vpack.c.b16 %v361, %v361
  %v426 = vpack.c.b16 %v362, %v362
  %v427 = vpack.c.b16 %v363, %v363
  %v428 = vpack.c.b16 %v364, %v364
  %v429 = vpack.c.b16 %v365, %v365
  %v430 = vpack.c.b16 %v366, %v366
  %v431 = vpack.c.b16 %v367, %v367
  %v432 = vpack.c.b16 %v368, %v368
  %v433 = vpack.c.b16 %v369, %v369
  %v434 = vpack.c.b16 %v370, %v370
  %v435 = vpack.c.b16 %v371, %v371
  %v436 = vpack.c.b16 %v372, %v372
  %v437 = vpack.c.b16 %v373, %v373
  %v438 = vpack.c.b16 %v374, %v374
  %v439 = vpack.c.b16 %v375, %v375
  %v440 = vpack.c.b16 %v376, %v376
  %v441 = vpack.c.b16 %v377, %v377
  %v442 = vpack.c.b16 %v378, %v378
  %v443 = vpack.c.b16 %v379, %v379
  %v444 = vpack.c.b16 %v380, %v380
  %v445 = vpack.c.b16 %v381, %v381
  %v446 = vpack.c.b16 %v382, %v382
  %v447 = vpack.c.b16 %v383, %v383
  %v448 = vpack.c.b16 %v384, %v384
  %v449 = vpack.c.b16 %v385, %v385
  %v450 = vpack.c.b16 %v386, %v386
  %v451 = vpack.c.b16 %v387, %v387
  %v452 = vpack.c.b16 %v388, %v388
  %v453 = vpack.c.b16 %v389, %v389
  %v454 = vpack.c.b16 %v390, %v390
  %v455 = vpack.c.b16 %v391, %v391
  %v456 = vpack.c.b16 %v392, %v392
  %v457 = vpack.c.b16 %v393, %v393
  %v458 = vpack.c.b16 %v394, %v394
  %v459 = vpack.c.b16 %v395, %v395
  %v460 = vpack.c.b16 %v396, %v396
  %v461 = vpack.c.b16 %v397, %v397
  %v462 = vpack.c.b16 %v398, %v398
  %v463 = vpack.c.b16 %v399, %v399
  %v464 = vpack.c.b16 %v400, %v400
  %v465 = vpack.c.b16 %v401, %v401
  %v466 = vpack.c.b16 %v402, %v402
  %v467 = vpack.c.b16 %v403, %v403
  %v468 = vpack.c.b16 %v404, %v404
  %v469 = vpack.c.b16 %v405, %v405
  %v470 = vpack.c.b16 %v406, %v406
  %v471 = vpack.c.b16 %v407, %v407
  %v472 = vpack.c.b16 %v408, %v408
  %v473 = vpack.c.b16 %v409, %v409
  %v474 = vpack.c.b16 %v410, %v410
  %v475 = vpack.c.b16 %v411, %v411
  %540 = vst [vmem:[%s3] sm:$0xf] %v412
  %541 = vst [vmem:[%s3 + $0x4] sm:$0xf] %v413
  %542 = vst [vmem:[%s3 + $0x8] sm:$0xf] %v414
  %543 = vst [vmem:[%s3 + $0xc] sm:$0xf] %v415
  %544 = vst [vmem:[%s3 + $0x10] sm:$0xf] %v416
  %545 = vst [vmem:[%s3 + $0x14] sm:$0xf] %v417
  %546 = vst [vmem:[%s3 + $0x18] sm:$0xf] %v418
  %547 = vst [vmem:[%s3 + $0x1c] sm:$0xf] %v419
  %548 = vst [vmem:[%s3 + $0x20] sm:$0xf] %v420
  %549 = vst [vmem:[%s3 + $0x24] sm:$0xf] %v421
  %550 = vst [vmem:[%s3 + $0x28] sm:$0xf] %v422
  %551 = vst [vmem:[%s3 + $0x2c] sm:$0xf] %v423
  %552 = vst [vmem:[%s3 + $0x30] sm:$0xf] %v424
  %553 = vst [vmem:[%s3 + $0x34] sm:$0xf] %v425
  %554 = vst [vmem:[%s3 + $0x38] sm:$0xf] %v426
  %555 = vst [vmem:[%s3 + $0x3c] sm:$0xf] %v427
  %556 = vst [vmem:[%s3 + $0x40] sm:$0xf] %v428
  %557 = vst [vmem:[%s3 + $0x44] sm:$0xf] %v429
  %558 = vst [vmem:[%s3 + $0x48] sm:$0xf] %v430
  %559 = vst [vmem:[%s3 + $0x4c] sm:$0xf] %v431
  %560 = vst [vmem:[%s3 + $0x50] sm:$0xf] %v432
  %561 = vst [vmem:[%s3 + $0x54] sm:$0xf] %v433
  %562 = vst [vmem:[%s3 + $0x58] sm:$0xf] %v434
  %563 = vst [vmem:[%s3 + $0x5c] sm:$0xf] %v435
  %564 = vst [vmem:[%s3 + $0x60] sm:$0xf] %v436
  %565 = vst [vmem:[%s3 + $0x64] sm:$0xf] %v437
  %566 = vst [vmem:[%s3 + $0x68] sm:$0xf] %v438
  %567 = vst [vmem:[%s3 + $0x6c] sm:$0xf] %v439
  %568 = vst [vmem:[%s3 + $0x70] sm:$0xf] %v440
  %569 = vst [vmem:[%s3 + $0x74] sm:$0xf] %v441
  %570 = vst [vmem:[%s3 + $0x78] sm:$0xf] %v442
  %571 = vst [vmem:[%s3 + $0x7c] sm:$0xf] %v443
  %572 = vst [vmem:[%s3 + $0x80] sm:$0xf] %v444
  %573 = vst [vmem:[%s3 + $0x84] sm:$0xf] %v445
  %574 = vst [vmem:[%s3 + $0x88] sm:$0xf] %v446
  %575 = vst [vmem:[%s3 + $0x8c] sm:$0xf] %v447
  %576 = vst [vmem:[%s3 + $0x90] sm:$0xf] %v448
  %577 = vst [vmem:[%s3 + $0x94] sm:$0xf] %v449
  %578 = vst [vmem:[%s3 + $0x98] sm:$0xf] %v450
  %579 = vst [vmem:[%s3 + $0x9c] sm:$0xf] %v451
  %580 = vst [vmem:[%s3 + $0xa0] sm:$0xf] %v452
  %581 = vst [vmem:[%s3 + $0xa4] sm:$0xf] %v453
  %582 = vst [vmem:[%s3 + $0xa8] sm:$0xf] %v454
  %583 = vst [vmem:[%s3 + $0xac] sm:$0xf] %v455
  %584 = vst [vmem:[%s3 + $0xb0] sm:$0xf] %v456
  %585 = vst [vmem:[%s3 + $0xb4] sm:$0xf] %v457
  %586 = vst [vmem:[%s3 + $0xb8] sm:$0xf] %v458
  %587 = vst [vmem:[%s3 + $0xbc] sm:$0xf] %v459
  %588 = vst [vmem:[%s3 + $0xc0] sm:$0xf] %v460
  %589 = vst [vmem:[%s3 + $0xc4] sm:$0xf] %v461
  %590 = vst [vmem:[%s3 + $0xc8] sm:$0xf] %v462
  %591 = vst [vmem:[%s3 + $0xcc] sm:$0xf] %v463
  %592 = vst [vmem:[%s3 + $0xd0] sm:$0xf] %v464
  %593 = vst [vmem:[%s3 + $0xd4] sm:$0xf] %v465
  %594 = vst [vmem:[%s3 + $0xd8] sm:$0xf] %v466
  %595 = vst [vmem:[%s3 + $0xdc] sm:$0xf] %v467
  %596 = vst [vmem:[%s3 + $0xe0] sm:$0xf] %v468
  %597 = vst [vmem:[%s3 + $0xe4] sm:$0xf] %v469
  %598 = vst [vmem:[%s3 + $0xe8] sm:$0xf] %v470
  %599 = vst [vmem:[%s3 + $0xec] sm:$0xf] %v471
  %600 = vst [vmem:[%s3 + $0xf0] sm:$0xf] %v472
  %601 = vst [vmem:[%s3 + $0xf4] sm:$0xf] %v473
  %602 = vst [vmem:[%s3 + $0xf8] sm:$0xf] %v474
  %603 = vst [vmem:[%s3 + $0xfc] sm:$0xf] %v475
  // Predicated region
  $region14: #{residual_block_forward.5} parent=0 // pred_check
    _
  $region15: #{residual_block_forward.5} parent=0 // pred_check_branch
    %605 = sbr.rel (0) target = $region17
  $region16: #{residual_block_forward.5} parent=0 // pred_region
    _
  $region17: #{residual_block_forward.5} parent=0 // pred_fallthru
    _
  // Predicated region
  $region18: #{residual_block_forward.5} parent=0 // pred_check
    _
  $region19: #{residual_block_forward.5} parent=0 // pred_check_branch
    %607 = sbr.rel (0) target = $region21
  $region20: #{residual_block_forward.5} parent=0 // pred_region
    _
  $region21: #{residual_block_forward.5} parent=0 // pred_fallthru
    _

// kernel: residual_block_forward.4
$region0: #{residual_block_forward.4}
  #allocation0 [shape = 'u32[]', space=smem, size = 0x4, offset = 0x4, fixed_abs, tag = 'smem constant byte address 0x4 - core index']
  #allocation1 [shape = 'u32[144,128]{1,0:T(1,128)}', space=vmem, size = 0x12000, scoped, tag = 'internal scratch']
  #allocation2 [shape = 'f32[512,128]{1,0:T(8,128)}', space=vmem, size = 0x40000, scoped, tag = 'scratch operand']
  %s0 = inlined_call_operand.vmem [shape: bf16[512,128], index: 0, kind: input, shape index: {}]
  %s1 = inlined_call_operand.vmem [shape: bf16[128,128], index: 1, kind: input, shape index: {}]
  %s2 = inlined_call_operand.vmem [shape: f32[512,128], index: 2, kind: output, shape index: {0}]
  %s3 = inlined_call_operand.vmem [shape: f32[1,8,128], index: 3, kind: output, shape index: {1}]
  %4 = xla_tuple %s2, %s3
  %s5 = sld [smem:[#allocation0]]
  $region34: #{residual_block_forward.4} parent=0
    _
  %s7 = ssub.s32 1, %s5
  %s8 = scalar_select 0, %s7, %s5
  // Predicated region
  $region2: #{residual_block_forward.4} parent=0 // pred_check
    _
  $region3: #{residual_block_forward.4} parent=0 // pred_check_branch
    %10 = sbr.rel (0) target = $region5
  $region4: #{residual_block_forward.4} parent=0 // pred_region
    _
  $region5: #{residual_block_forward.4} parent=0 // pred_fallthru
    _
  // Predicated region
  $region6: #{residual_block_forward.4} parent=0 // pred_check
    _
  $region7: #{residual_block_forward.4} parent=0 // pred_check_branch
    %12 = sbr.rel (0) target = $region9
  $region8: #{residual_block_forward.4} parent=0 // pred_region
    _
  $region9: #{residual_block_forward.4} parent=0 // pred_fallthru
    _
  %p14 = scmp.eq.s32.totalorder 0, 0
  // Predicated region
  $region10: #{residual_block_forward.4} parent=0 // pred_check
    %p15 = pneg %p14
  $region11: #{residual_block_forward.4} parent=0 // pred_check_branch
    %17 = sbr.rel (%p15) target = $region13
  $region12: #{residual_block_forward.4} parent=0 // pred_region
    %18 = vst [vmem:[#allocation2] sm:$0xff] 0.0
    %19 = vst [vmem:[#allocation2 + $0x8] sm:$0xff] 0.0
    %20 = vst [vmem:[#allocation2 + $0x10] sm:$0xff] 0.0
    %21 = vst [vmem:[#allocation2 + $0x18] sm:$0xff] 0.0
    %22 = vst [vmem:[#allocation2 + $0x20] sm:$0xff] 0.0
    %23 = vst [vmem:[#allocation2 + $0x28] sm:$0xff] 0.0
    %24 = vst [vmem:[#allocation2 + $0x30] sm:$0xff] 0.0
    %25 = vst [vmem:[#allocation2 + $0x38] sm:$0xff] 0.0
    %26 = vst [vmem:[#allocation2 + $0x40] sm:$0xff] 0.0
    %27 = vst [vmem:[#allocation2 + $0x48] sm:$0xff] 0.0
    %28 = vst [vmem:[#allocation2 + $0x50] sm:$0xff] 0.0
    %29 = vst [vmem:[#allocation2 + $0x58] sm:$0xff] 0.0
    %30 = vst [vmem:[#allocation2 + $0x60] sm:$0xff] 0.0
    %31 = vst [vmem:[#allocation2 + $0x68] sm:$0xff] 0.0
    %32 = vst [vmem:[#allocation2 + $0x70] sm:$0xff] 0.0
    %33 = vst [vmem:[#allocation2 + $0x78] sm:$0xff] 0.0
    %34 = vst [vmem:[#allocation2 + $0x80] sm:$0xff] 0.0
    %35 = vst [vmem:[#allocation2 + $0x88] sm:$0xff] 0.0
    %36 = vst [vmem:[#allocation2 + $0x90] sm:$0xff] 0.0
    %37 = vst [vmem:[#allocation2 + $0x98] sm:$0xff] 0.0
    %38 = vst [vmem:[#allocation2 + $0xa0] sm:$0xff] 0.0
    %39 = vst [vmem:[#allocation2 + $0xa8] sm:$0xff] 0.0
    %40 = vst [vmem:[#allocation2 + $0xb0] sm:$0xff] 0.0
    %41 = vst [vmem:[#allocation2 + $0xb8] sm:$0xff] 0.0
    %42 = vst [vmem:[#allocation2 + $0xc0] sm:$0xff] 0.0
    %43 = vst [vmem:[#allocation2 + $0xc8] sm:$0xff] 0.0
    %44 = vst [vmem:[#allocation2 + $0xd0] sm:$0xff] 0.0
    %45 = vst [vmem:[#allocation2 + $0xd8] sm:$0xff] 0.0
    %46 = vst [vmem:[#allocation2 + $0xe0] sm:$0xff] 0.0
    %47 = vst [vmem:[#allocation2 + $0xe8] sm:$0xff] 0.0
    %48 = vst [vmem:[#allocation2 + $0xf0] sm:$0xff] 0.0
    %49 = vst [vmem:[#allocation2 + $0xf8] sm:$0xff] 0.0
    %50 = vst [vmem:[#allocation2 + $0x100] sm:$0xff] 0.0
    %51 = vst [vmem:[#allocation2 + $0x108] sm:$0xff] 0.0
    %52 = vst [vmem:[#allocation2 + $0x110] sm:$0xff] 0.0
    %53 = vst [vmem:[#allocation2 + $0x118] sm:$0xff] 0.0
    %54 = vst [vmem:[#allocation2 + $0x120] sm:$0xff] 0.0
    %55 = vst [vmem:[#allocation2 + $0x128] sm:$0xff] 0.0
    %56 = vst [vmem:[#allocation2 + $0x130] sm:$0xff] 0.0
    %57 = vst [vmem:[#allocation2 + $0x138] sm:$0xff] 0.0
    %58 = vst [vmem:[#allocation2 + $0x140] sm:$0xff] 0.0
    %59 = vst [vmem:[#allocation2 + $0x148] sm:$0xff] 0.0
    %60 = vst [vmem:[#allocation2 + $0x150] sm:$0xff] 0.0
    %61 = vst [vmem:[#allocation2 + $0x158] sm:$0xff] 0.0
    %62 = vst [vmem:[#allocation2 + $0x160] sm:$0xff] 0.0
    %63 = vst [vmem:[#allocation2 + $0x168] sm:$0xff] 0.0
    %64 = vst [vmem:[#allocation2 + $0x170] sm:$0xff] 0.0
    %65 = vst [vmem:[#allocation2 + $0x178] sm:$0xff] 0.0
    %66 = vst [vmem:[#allocation2 + $0x180] sm:$0xff] 0.0
    %67 = vst [vmem:[#allocation2 + $0x188] sm:$0xff] 0.0
    %68 = vst [vmem:[#allocation2 + $0x190] sm:$0xff] 0.0
    %69 = vst [vmem:[#allocation2 + $0x198] sm:$0xff] 0.0
    %70 = vst [vmem:[#allocation2 + $0x1a0] sm:$0xff] 0.0
    %71 = vst [vmem:[#allocation2 + $0x1a8] sm:$0xff] 0.0
    %72 = vst [vmem:[#allocation2 + $0x1b0] sm:$0xff] 0.0
    %73 = vst [vmem:[#allocation2 + $0x1b8] sm:$0xff] 0.0
    %74 = vst [vmem:[#allocation2 + $0x1c0] sm:$0xff] 0.0
    %75 = vst [vmem:[#allocation2 + $0x1c8] sm:$0xff] 0.0
    %76 = vst [vmem:[#allocation2 + $0x1d0] sm:$0xff] 0.0
    %77 = vst [vmem:[#allocation2 + $0x1d8] sm:$0xff] 0.0
    %78 = vst [vmem:[#allocation2 + $0x1e0] sm:$0xff] 0.0
    %79 = vst [vmem:[#allocation2 + $0x1e8] sm:$0xff] 0.0
    %80 = vst [vmem:[#allocation2 + $0x1f0] sm:$0xff] 0.0
    %81 = vst [vmem:[#allocation2 + $0x1f8] sm:$0xff] 0.0
  $region13: #{residual_block_forward.4} parent=0 // pred_fallthru
    _
  %v82 = vld [vmem:[#allocation2] sm:$0xff]
  %v83 = vld [vmem:[#allocation2 + $0x8] sm:$0xff]
  %v84 = vld [vmem:[#allocation2 + $0x10] sm:$0xff]
  %v85 = vld [vmem:[#allocation2 + $0x18] sm:$0xff]
  %v86 = vld [vmem:[#allocation2 + $0x20] sm:$0xff]
  %v87 = vld [vmem:[#allocation2 + $0x28] sm:$0xff]
  %v88 = vld [vmem:[#allocation2 + $0x30] sm:$0xff]
  %v89 = vld [vmem:[#allocation2 + $0x38] sm:$0xff]
  %v90 = vld [vmem:[#allocation2 + $0x40] sm:$0xff]
  %v91 = vld [vmem:[#allocation2 + $0x48] sm:$0xff]
  %v92 = vld [vmem:[#allocation2 + $0x50] sm:$0xff]
  %v93 = vld [vmem:[#allocation2 + $0x58] sm:$0xff]
  %v94 = vld [vmem:[#allocation2 + $0x60] sm:$0xff]
  %v95 = vld [vmem:[#allocation2 + $0x68] sm:$0xff]
  %v96 = vld [vmem:[#allocation2 + $0x70] sm:$0xff]
  %v97 = vld [vmem:[#allocation2 + $0x78] sm:$0xff]
  %v98 = vld [vmem:[#allocation2 + $0x80] sm:$0xff]
  %v99 = vld [vmem:[#allocation2 + $0x88] sm:$0xff]
  %v100 = vld [vmem:[#allocation2 + $0x90] sm:$0xff]
  %v101 = vld [vmem:[#allocation2 + $0x98] sm:$0xff]
  %v102 = vld [vmem:[#allocation2 + $0xa0] sm:$0xff]
  %v103 = vld [vmem:[#allocation2 + $0xa8] sm:$0xff]
  %v104 = vld [vmem:[#allocation2 + $0xb0] sm:$0xff]
  %v105 = vld [vmem:[#allocation2 + $0xb8] sm:$0xff]
  %v106 = vld [vmem:[#allocation2 + $0xc0] sm:$0xff]
  %v107 = vld [vmem:[#allocation2 + $0xc8] sm:$0xff]
  %v108 = vld [vmem:[#allocation2 + $0xd0] sm:$0xff]
  %v109 = vld [vmem:[#allocation2 + $0xd8] sm:$0xff]
  %v110 = vld [vmem:[#allocation2 + $0xe0] sm:$0xff]
  %v111 = vld [vmem:[#allocation2 + $0xe8] sm:$0xff]
  %v112 = vld [vmem:[#allocation2 + $0xf0] sm:$0xff]
  %v113 = vld [vmem:[#allocation2 + $0xf8] sm:$0xff]
  %v114 = vld [vmem:[#allocation2 + $0x100] sm:$0xff]
  %v115 = vld [vmem:[#allocation2 + $0x108] sm:$0xff]
  %v116 = vld [vmem:[#allocation2 + $0x110] sm:$0xff]
  %v117 = vld [vmem:[#allocation2 + $0x118] sm:$0xff]
  %v118 = vld [vmem:[#allocation2 + $0x120] sm:$0xff]
  %v119 = vld [vmem:[#allocation2 + $0x128] sm:$0xff]
  %v120 = vld [vmem:[#allocation2 + $0x130] sm:$0xff]
  %v121 = vld [vmem:[#allocation2 + $0x138] sm:$0xff]
  %v122 = vld [vmem:[#allocation2 + $0x140] sm:$0xff]
  %v123 = vld [vmem:[#allocation2 + $0x148] sm:$0xff]
  %v124 = vld [vmem:[#allocation2 + $0x150] sm:$0xff]
  %v125 = vld [vmem:[#allocation2 + $0x158] sm:$0xff]
  %v126 = vld [vmem:[#allocation2 + $0x160] sm:$0xff]
  %v127 = vld [vmem:[#allocation2 + $0x168] sm:$0xff]
  %v128 = vld [vmem:[#allocation2 + $0x170] sm:$0xff]
  %v129 = vld [vmem:[#allocation2 + $0x178] sm:$0xff]
  %v130 = vld [vmem:[#allocation2 + $0x180] sm:$0xff]
  %v131 = vld [vmem:[#allocation2 + $0x188] sm:$0xff]
  %v132 = vld [vmem:[#allocation2 + $0x190] sm:$0xff]
  %v133 = vld [vmem:[#allocation2 + $0x198] sm:$0xff]
  %v134 = vld [vmem:[#allocation2 + $0x1a0] sm:$0xff]
  %v135 = vld [vmem:[#allocation2 + $0x1a8] sm:$0xff]
  %v136 = vld [vmem:[#allocation2 + $0x1b0] sm:$0xff]
  %v137 = vld [vmem:[#allocation2 + $0x1b8] sm:$0xff]
  %v138 = vld [vmem:[#allocation2 + $0x1c0] sm:$0xff]
  %v139 = vld [vmem:[#allocation2 + $0x1c8] sm:$0xff]
  %v140 = vld [vmem:[#allocation2 + $0x1d0] sm:$0xff]
  %v141 = vld [vmem:[#allocation2 + $0x1d8] sm:$0xff]
  %v142 = vld [vmem:[#allocation2 + $0x1e0] sm:$0xff]
  %v143 = vld [vmem:[#allocation2 + $0x1e8] sm:$0xff]
  %v144 = vld [vmem:[#allocation2 + $0x1f0] sm:$0xff]
  %v145 = vld [vmem:[#allocation2 + $0x1f8] sm:$0xff]
  %v146 = vld [vmem:[%s0] sm:$0xf]
  %v147 = vld [vmem:[%s0 + $0x4] sm:$0xf]
  %v148 = vld [vmem:[%s0 + $0x8] sm:$0xf]
  %v149 = vld [vmem:[%s0 + $0xc] sm:$0xf]
  %v150 = vld [vmem:[%s0 + $0x10] sm:$0xf]
  %v151 = vld [vmem:[%s0 + $0x14] sm:$0xf]
  %v152 = vld [vmem:[%s0 + $0x18] sm:$0xf]
  %v153 = vld [vmem:[%s0 + $0x1c] sm:$0xf]
  %v154 = vld [vmem:[%s0 + $0x20] sm:$0xf]
  %v155 = vld [vmem:[%s0 + $0x24] sm:$0xf]
  %v156 = vld [vmem:[%s0 + $0x28] sm:$0xf]
  %v157 = vld [vmem:[%s0 + $0x2c] sm:$0xf]
  %v158 = vld [vmem:[%s0 + $0x30] sm:$0xf]
  %v159 = vld [vmem:[%s0 + $0x34] sm:$0xf]
  %v160 = vld [vmem:[%s0 + $0x38] sm:$0xf]
  %v161 = vld [vmem:[%s0 + $0x3c] sm:$0xf]
  %v162 = vld [vmem:[%s0 + $0x40] sm:$0xf]
  %v163 = vld [vmem:[%s0 + $0x44] sm:$0xf]
  %v164 = vld [vmem:[%s0 + $0x48] sm:$0xf]
  %v165 = vld [vmem:[%s0 + $0x4c] sm:$0xf]
  %v166 = vld [vmem:[%s0 + $0x50] sm:$0xf]
  %v167 = vld [vmem:[%s0 + $0x54] sm:$0xf]
  %v168 = vld [vmem:[%s0 + $0x58] sm:$0xf]
  %v169 = vld [vmem:[%s0 + $0x5c] sm:$0xf]
  %v170 = vld [vmem:[%s0 + $0x60] sm:$0xf]
  %v171 = vld [vmem:[%s0 + $0x64] sm:$0xf]
  %v172 = vld [vmem:[%s0 + $0x68] sm:$0xf]
  %v173 = vld [vmem:[%s0 + $0x6c] sm:$0xf]
  %v174 = vld [vmem:[%s0 + $0x70] sm:$0xf]
  %v175 = vld [vmem:[%s0 + $0x74] sm:$0xf]
  %v176 = vld [vmem:[%s0 + $0x78] sm:$0xf]
  %v177 = vld [vmem:[%s0 + $0x7c] sm:$0xf]
  %v178 = vld [vmem:[%s0 + $0x80] sm:$0xf]
  %v179 = vld [vmem:[%s0 + $0x84] sm:$0xf]
  %v180 = vld [vmem:[%s0 + $0x88] sm:$0xf]
  %v181 = vld [vmem:[%s0 + $0x8c] sm:$0xf]
  %v182 = vld [vmem:[%s0 + $0x90] sm:$0xf]
  %v183 = vld [vmem:[%s0 + $0x94] sm:$0xf]
  %v184 = vld [vmem:[%s0 + $0x98] sm:$0xf]
  %v185 = vld [vmem:[%s0 + $0x9c] sm:$0xf]
  %v186 = vld [vmem:[%s0 + $0xa0] sm:$0xf]
  %v187 = vld [vmem:[%s0 + $0xa4] sm:$0xf]
  %v188 = vld [vmem:[%s0 + $0xa8] sm:$0xf]
  %v189 = vld [vmem:[%s0 + $0xac] sm:$0xf]
  %v190 = vld [vmem:[%s0 + $0xb0] sm:$0xf]
  %v191 = vld [vmem:[%s0 + $0xb4] sm:$0xf]
  %v192 = vld [vmem:[%s0 + $0xb8] sm:$0xf]
  %v193 = vld [vmem:[%s0 + $0xbc] sm:$0xf]
  %v194 = vld [vmem:[%s0 + $0xc0] sm:$0xf]
  %v195 = vld [vmem:[%s0 + $0xc4] sm:$0xf]
  %v196 = vld [vmem:[%s0 + $0xc8] sm:$0xf]
  %v197 = vld [vmem:[%s0 + $0xcc] sm:$0xf]
  %v198 = vld [vmem:[%s0 + $0xd0] sm:$0xf]
  %v199 = vld [vmem:[%s0 + $0xd4] sm:$0xf]
  %v200 = vld [vmem:[%s0 + $0xd8] sm:$0xf]
  %v201 = vld [vmem:[%s0 + $0xdc] sm:$0xf]
  %v202 = vld [vmem:[%s0 + $0xe0] sm:$0xf]
  %v203 = vld [vmem:[%s0 + $0xe4] sm:$0xf]
  %v204 = vld [vmem:[%s0 + $0xe8] sm:$0xf]
  %v205 = vld [vmem:[%s0 + $0xec] sm:$0xf]
  %v206 = vld [vmem:[%s0 + $0xf0] sm:$0xf]
  %v207 = vld [vmem:[%s0 + $0xf4] sm:$0xf]
  %v208 = vld [vmem:[%s0 + $0xf8] sm:$0xf]
  %v209 = vld [vmem:[%s0 + $0xfc] sm:$0xf]
  %v210 = vld [vmem:[%s1] sm:$0xf]
  %v211 = vld [vmem:[%s1 + $0x4] sm:$0xf]
  %v212 = vld [vmem:[%s1 + $0x8] sm:$0xf]
  %v213 = vld [vmem:[%s1 + $0xc] sm:$0xf]
  %v214 = vld [vmem:[%s1 + $0x10] sm:$0xf]
  %v215 = vld [vmem:[%s1 + $0x14] sm:$0xf]
  %v216 = vld [vmem:[%s1 + $0x18] sm:$0xf]
  %v217 = vld [vmem:[%s1 + $0x1c] sm:$0xf]
  %v218 = vld [vmem:[%s1 + $0x20] sm:$0xf]
  %v219 = vld [vmem:[%s1 + $0x24] sm:$0xf]
  %v220 = vld [vmem:[%s1 + $0x28] sm:$0xf]
  %v221 = vld [vmem:[%s1 + $0x2c] sm:$0xf]
  %v222 = vld [vmem:[%s1 + $0x30] sm:$0xf]
  %v223 = vld [vmem:[%s1 + $0x34] sm:$0xf]
  %v224 = vld [vmem:[%s1 + $0x38] sm:$0xf]
  %v225 = vld [vmem:[%s1 + $0x3c] sm:$0xf]
  %v290 = vunpack.c.l.b16 %v146
  %v291 = vunpack.c.l.b16 %v147
  %v292 = vunpack.c.l.b16 %v148
  %v293 = vunpack.c.l.b16 %v149
  %v294 = vunpack.c.l.b16 %v150
  %v295 = vunpack.c.l.b16 %v151
  %v296 = vunpack.c.l.b16 %v152
  %v297 = vunpack.c.l.b16 %v153
  %v298 = vunpack.c.l.b16 %v154
  %v299 = vunpack.c.l.b16 %v155
  %v300 = vunpack.c.l.b16 %v156
  %v301 = vunpack.c.l.b16 %v157
  %v302 = vunpack.c.l.b16 %v158
  %v303 = vunpack.c.l.b16 %v159
  %v304 = vunpack.c.l.b16 %v160
  %v305 = vunpack.c.l.b16 %v161
  %v306 = vunpack.c.l.b16 %v162
  %v307 = vunpack.c.l.b16 %v163
  %v308 = vunpack.c.l.b16 %v164
  %v309 = vunpack.c.l.b16 %v165
  %v310 = vunpack.c.l.b16 %v166
  %v311 = vunpack.c.l.b16 %v167
  %v312 = vunpack.c.l.b16 %v168
  %v313 = vunpack.c.l.b16 %v169
  %v314 = vunpack.c.l.b16 %v170
  %v315 = vunpack.c.l.b16 %v171
  %v316 = vunpack.c.l.b16 %v172
  %v317 = vunpack.c.l.b16 %v173
  %v318 = vunpack.c.l.b16 %v174
  %v319 = vunpack.c.l.b16 %v175
  %v320 = vunpack.c.l.b16 %v176
  %v321 = vunpack.c.l.b16 %v177
  %v322 = vunpack.c.l.b16 %v178
  %v323 = vunpack.c.l.b16 %v179
  %v324 = vunpack.c.l.b16 %v180
  %v325 = vunpack.c.l.b16 %v181
  %v326 = vunpack.c.l.b16 %v182
  %v327 = vunpack.c.l.b16 %v183
  %v328 = vunpack.c.l.b16 %v184
  %v329 = vunpack.c.l.b16 %v185
  %v330 = vunpack.c.l.b16 %v186
  %v331 = vunpack.c.l.b16 %v187
  %v332 = vunpack.c.l.b16 %v188
  %v333 = vunpack.c.l.b16 %v189
  %v334 = vunpack.c.l.b16 %v190
  %v335 = vunpack.c.l.b16 %v191
  %v336 = vunpack.c.l.b16 %v192
  %v337 = vunpack.c.l.b16 %v193
  %v338 = vunpack.c.l.b16 %v194
  %v339 = vunpack.c.l.b16 %v195
  %v340 = vunpack.c.l.b16 %v196
  %v341 = vunpack.c.l.b16 %v197
  %v342 = vunpack.c.l.b16 %v198
  %v343 = vunpack.c.l.b16 %v199
  %v344 = vunpack.c.l.b16 %v200
  %v345 = vunpack.c.l.b16 %v201
  %v346 = vunpack.c.l.b16 %v202
  %v347 = vunpack.c.l.b16 %v203
  %v348 = vunpack.c.l.b16 %v204
  %v349 = vunpack.c.l.b16 %v205
  %v350 = vunpack.c.l.b16 %v206
  %v351 = vunpack.c.l.b16 %v207
  %v352 = vunpack.c.l.b16 %v208
  %v353 = vunpack.c.l.b16 %v209
  %v354 = vpack.c.b16 %v291, %v290
  %v355 = vpack.c.b16 %v293, %v292
  %v356 = vpack.c.b16 %v295, %v294
  %v357 = vpack.c.b16 %v297, %v296
  %v358 = vpack.c.b16 %v299, %v298
  %v359 = vpack.c.b16 %v301, %v300
  %v360 = vpack.c.b16 %v303, %v302
  %v361 = vpack.c.b16 %v305, %v304
  %v362 = vpack.c.b16 %v307, %v306
  %v363 = vpack.c.b16 %v309, %v308
  %v364 = vpack.c.b16 %v311, %v310
  %v365 = vpack.c.b16 %v313, %v312
  %v366 = vpack.c.b16 %v315, %v314
  %v367 = vpack.c.b16 %v317, %v316
  %v368 = vpack.c.b16 %v319, %v318
  %v369 = vpack.c.b16 %v321, %v320
  %v370 = vpack.c.b16 %v323, %v322
  %v371 = vpack.c.b16 %v325, %v324
  %v372 = vpack.c.b16 %v327, %v326
  %v373 = vpack.c.b16 %v329, %v328
  %v374 = vpack.c.b16 %v331, %v330
  %v375 = vpack.c.b16 %v333, %v332
  %v376 = vpack.c.b16 %v335, %v334
  %v377 = vpack.c.b16 %v337, %v336
  %v378 = vpack.c.b16 %v339, %v338
  %v379 = vpack.c.b16 %v341, %v340
  %v380 = vpack.c.b16 %v343, %v342
  %v381 = vpack.c.b16 %v345, %v344
  %v382 = vpack.c.b16 %v347, %v346
  %v383 = vpack.c.b16 %v349, %v348
  %v384 = vpack.c.b16 %v351, %v350
  %v385 = vpack.c.b16 %v353, %v352
  %v434 = vunpack.c.l.b16 %v210
  %v435 = vunpack.c.l.b16 %v211
  %v436 = vunpack.c.l.b16 %v212
  %v437 = vunpack.c.l.b16 %v213
  %v438 = vunpack.c.l.b16 %v214
  %v439 = vunpack.c.l.b16 %v215
  %v440 = vunpack.c.l.b16 %v216
  %v441 = vunpack.c.l.b16 %v217
  %v442 = vunpack.c.l.b16 %v218
  %v443 = vunpack.c.l.b16 %v219
  %v444 = vunpack.c.l.b16 %v220
  %v445 = vunpack.c.l.b16 %v221
  %v446 = vunpack.c.l.b16 %v222
  %v447 = vunpack.c.l.b16 %v223
  %v448 = vunpack.c.l.b16 %v224
  %v449 = vunpack.c.l.b16 %v225
  %v450 = vpack.c.b16 %v435, %v434
  %v451 = vpack.c.b16 %v437, %v436
  %v452 = vpack.c.b16 %v439, %v438
  %v453 = vpack.c.b16 %v441, %v440
  %v454 = vpack.c.b16 %v443, %v442
  %v455 = vpack.c.b16 %v445, %v444
  %v456 = vpack.c.b16 %v447, %v446
  %v457 = vpack.c.b16 %v449, %v448
  %466 = vmatprep.subr.bf16.mxu0 0
  %467 = vmatpush1.bf16.msra.mxu0 %v450
  %468 = vmatprep.subr.bf16.mxu0 0
  %469 = vmatpush1.bf16.msra.mxu0 %v451
  %470 = vmatprep.subr.bf16.mxu0 0
  %471 = vmatpush1.bf16.msra.mxu0 %v452
  %472 = vmatprep.subr.bf16.mxu0 0
  %473 = vmatpush1.bf16.msra.mxu0 %v453
  %474 = vmatprep.subr.bf16.mxu0 0
  %475 = vmatpush1.bf16.msra.mxu0 %v454
  %476 = vmatprep.subr.bf16.mxu0 0
  %477 = vmatpush1.bf16.msra.mxu0 %v455
  %478 = vmatprep.subr.bf16.mxu0 0
  %479 = vmatpush1.bf16.msra.mxu0 %v456
  %480 = vmatprep.subr.bf16.mxu0 0
  %481 = vmatpush1.bf16.msra.mxu0 %v457
  %482 = vmatprep.subr.bf16.mxu0 0
  %483 = vmatpush1.bf16.msra.mxu0 0
  %484 = vmatprep.subr.bf16.mxu0 0
  %485 = vmatpush1.bf16.msra.mxu0 0
  %486 = vmatprep.subr.bf16.mxu0 0
  %487 = vmatpush1.bf16.msra.mxu0 0
  %488 = vmatprep.subr.bf16.mxu0 0
  %489 = vmatpush1.bf16.msra.mxu0 0
  %490 = vmatprep.subr.bf16.mxu0 0
  %491 = vmatpush1.bf16.msra.mxu0 0
  %492 = vmatprep.subr.bf16.mxu0 0
  %493 = vmatpush1.bf16.msra.mxu0 0
  %494 = vmatprep.subr.bf16.mxu0 0
  %495 = vmatpush1.bf16.msra.mxu0 0
  %496 = vmatprep.subr.bf16.mxu0 0
  %497 = vmatpush1.bf16.msra.mxu0 0
  %498 = vmatprep.mubr.bf16.mxu0 0
  %499 = vmatmul.mubr.bf16.gmra.mrb[0].mxu0 %v354
  %v500 = vpop.f32.mrb[0].mxu0
  %v501 = vadd.f32 0.0, %v500
  %v502 = vpop.f32.mrb[0].mxu0
  %v503 = vpop.f32.mrb[0].mxu0
  %v504 = vadd.f32 0.0, %v503
  %v505 = vpop.f32.mrb[0].mxu0
  %506 = vmatprep.mubr.bf16.mxu0 0
  %507 = vmatmul.mubr.bf16.gmra.mrb[0].mxu0 %v355
  %v508 = vpop.f32.mrb[0].mxu0
  %v509 = vadd.f32 0.0, %v508
  %v510 = vpop.f32.mrb[0].mxu0
  %v511 = vpop.f32.mrb[0].mxu0
  %v512 = vadd.f32 0.0, %v511
  %v513 = vpop.f32.mrb[0].mxu0
  %514 = vmatprep.mubr.bf16.mxu0 0
  %515 = vmatmul.mubr.bf16.gmra.mrb[0].mxu0 %v356
  %v516 = vpop.f32.mrb[0].mxu0
  %v517 = vadd.f32 0.0, %v516
  %v518 = vpop.f32.mrb[0].mxu0
  %v519 = vpop.f32.mrb[0].mxu0
  %v520 = vadd.f32 0.0, %v519
  %v521 = vpop.f32.mrb[0].mxu0
  %522 = vmatprep.mubr.bf16.mxu0 0
  %523 = vmatmul.mubr.bf16.gmra.mrb[0].mxu0 %v357
  %v524 = vpop.f32.mrb[0].mxu0
  %v525 = vadd.f32 0.0, %v524
  %v526 = vpop.f32.mrb[0].mxu0
  %v527 = vpop.f32.mrb[0].mxu0
  %v528 = vadd.f32 0.0, %v527
  %v529 = vpop.f32.mrb[0].mxu0
  %530 = vmatprep.mubr.bf16.mxu0 0
  %531 = vmatmul.mubr.bf16.gmra.mrb[0].mxu0 %v358
  %v532 = vpop.f32.mrb[0].mxu0
  %v533 = vadd.f32 0.0, %v532
  %v534 = vpop.f32.mrb[0].mxu0
  %v535 = vpop.f32.mrb[0].mxu0
  %v536 = vadd.f32 0.0, %v535
  %v537 = vpop.f32.mrb[0].mxu0
  %538 = vmatprep.mubr.bf16.mxu0 0
  %539 = vmatmul.mubr.bf16.gmra.mrb[0].mxu0 %v359
  %v540 = vpop.f32.mrb[0].mxu0
  %v541 = vadd.f32 0.0, %v540
  %v542 = vpop.f32.mrb[0].mxu0
  %v543 = vpop.f32.mrb[0].mxu0
  %v544 = vadd.f32 0.0, %v543
  %v545 = vpop.f32.mrb[0].mxu0
  %546 = vmatprep.mubr.bf16.mxu0 0
  %547 = vmatmul.mubr.bf16.gmra.mrb[0].mxu0 %v360
  %v548 = vpop.f32.mrb[0].mxu0
  %v549 = vadd.f32 0.0, %v548
  %v550 = vpop.f32.mrb[0].mxu0
  %v551 = vpop.f32.mrb[0].mxu0
  %v552 = vadd.f32 0.0, %v551
  %v553 = vpop.f32.mrb[0].mxu0
  %554 = vmatprep.mubr.bf16.mxu0 0
  %555 = vmatmul.mubr.bf16.gmra.mrb[0].mxu0 %v361
  %v556 = vpop.f32.mrb[0].mxu0
  %v557 = vadd.f32 0.0, %v556
  %v558 = vpop.f32.mrb[0].mxu0
  %v559 = vpop.f32.mrb[0].mxu0
  %v560 = vadd.f32 0.0, %v559
  %v561 = vpop.f32.mrb[0].mxu0
  %562 = vmatprep.mubr.bf16.mxu0 0
  %563 = vmatmul.mubr.bf16.gmra.mrb[0].mxu0 %v362
  %v564 = vpop.f32.mrb[0].mxu0
  %v565 = vadd.f32 0.0, %v564
  %v566 = vpop.f32.mrb[0].mxu0
  %v567 = vpop.f32.mrb[0].mxu0
  %v568 = vadd.f32 0.0, %v567
  %v569 = vpop.f32.mrb[0].mxu0
  %570 = vmatprep.mubr.bf16.mxu0 0
  %571 = vmatmul.mubr.bf16.gmra.mrb[0].mxu0 %v363
  %v572 = vpop.f32.mrb[0].mxu0
  %v573 = vadd.f32 0.0, %v572
  %v574 = vpop.f32.mrb[0].mxu0
  %v575 = vpop.f32.mrb[0].mxu0
  %v576 = vadd.f32 0.0, %v575
  %v577 = vpop.f32.mrb[0].mxu0
  %578 = vmatprep.mubr.bf16.mxu0 0
  %579 = vmatmul.mubr.bf16.gmra.mrb[0].mxu0 %v364
  %v580 = vpop.f32.mrb[0].mxu0
  %v581 = vadd.f32 0.0, %v580
  %v582 = vpop.f32.mrb[0].mxu0
  %v583 = vpop.f32.mrb[0].mxu0
  %v584 = vadd.f32 0.0, %v583
  %v585 = vpop.f32.mrb[0].mxu0
  %586 = vmatprep.mubr.bf16.mxu0 0
  %587 = vmatmul.mubr.bf16.gmra.mrb[0].mxu0 %v365
  %v588 = vpop.f32.mrb[0].mxu0
  %v589 = vadd.f32 0.0, %v588
  %v590 = vpop.f32.mrb[0].mxu0
  %v591 = vpop.f32.mrb[0].mxu0
  %v592 = vadd.f32 0.0, %v591
  %v593 = vpop.f32.mrb[0].mxu0
  %594 = vmatprep.mubr.bf16.mxu0 0
  %595 = vmatmul.mubr.bf16.gmra.mrb[0].mxu0 %v366
  %v596 = vpop.f32.mrb[0].mxu0
  %v597 = vadd.f32 0.0, %v596
  %v598 = vpop.f32.mrb[0].mxu0
  %v599 = vpop.f32.mrb[0].mxu0
  %v600 = vadd.f32 0.0, %v599
  %v601 = vpop.f32.mrb[0].mxu0
  %602 = vmatprep.mubr.bf16.mxu0 0
  %603 = vmatmul.mubr.bf16.gmra.mrb[0].mxu0 %v367
  %v604 = vpop.f32.mrb[0].mxu0
  %v605 = vadd.f32 0.0, %v604
  %v606 = vpop.f32.mrb[0].mxu0
  %v607 = vpop.f32.mrb[0].mxu0
  %v608 = vadd.f32 0.0, %v607
  %v609 = vpop.f32.mrb[0].mxu0
  %610 = vmatprep.mubr.bf16.mxu0 0
  %611 = vmatmul.mubr.bf16.gmra.mrb[0].mxu0 %v368
  %v612 = vpop.f32.mrb[0].mxu0
  %v613 = vadd.f32 0.0, %v612
  %v614 = vpop.f32.mrb[0].mxu0
  %v615 = vpop.f32.mrb[0].mxu0
  %v616 = vadd.f32 0.0, %v615
  %v617 = vpop.f32.mrb[0].mxu0
  %618 = vmatprep.mubr.bf16.mxu0 0
  %619 = vmatmul.mubr.bf16.gmra.mrb[0].mxu0 %v369
  %v620 = vpop.f32.mrb[0].mxu0
  %v621 = vadd.f32 0.0, %v620
  %v622 = vpop.f32.mrb[0].mxu0
  %v623 = vpop.f32.mrb[0].mxu0
  %v624 = vadd.f32 0.0, %v623
  %v625 = vpop.f32.mrb[0].mxu0
  %626 = vmatprep.mubr.bf16.mxu0 0
  %627 = vmatmul.mubr.bf16.gmra.mrb[0].mxu0 %v370
  %v628 = vpop.f32.mrb[0].mxu0
  %v629 = vadd.f32 0.0, %v628
  %v630 = vpop.f32.mrb[0].mxu0
  %v631 = vpop.f32.mrb[0].mxu0
  %v632 = vadd.f32 0.0, %v631
  %v633 = vpop.f32.mrb[0].mxu0
  %634 = vmatprep.mubr.bf16.mxu0 0
  %635 = vmatmul.mubr.bf16.gmra.mrb[0].mxu0 %v371
  %v636 = vpop.f32.mrb[0].mxu0
  %v637 = vadd.f32 0.0, %v636
  %v638 = vpop.f32.mrb[0].mxu0
  %v639 = vpop.f32.mrb[0].mxu0
  %v640 = vadd.f32 0.0, %v639
  %v641 = vpop.f32.mrb[0].mxu0
  %642 = vmatprep.mubr.bf16.mxu0 0
  %643 = vmatmul.mubr.bf16.gmra.mrb[0].mxu0 %v372
  %v644 = vpop.f32.mrb[0].mxu0
  %v645 = vadd.f32 0.0, %v644
  %v646 = vpop.f32.mrb[0].mxu0
  %v647 = vpop.f32.mrb[0].mxu0
  %v648 = vadd.f32 0.0, %v647
  %v649 = vpop.f32.mrb[0].mxu0
  %650 = vmatprep.mubr.bf16.mxu0 0
  %651 = vmatmul.mubr.bf16.gmra.mrb[0].mxu0 %v373
  %v652 = vpop.f32.mrb[0].mxu0
  %v653 = vadd.f32 0.0, %v652
  %v654 = vpop.f32.mrb[0].mxu0
  %v655 = vpop.f32.mrb[0].mxu0
  %v656 = vadd.f32 0.0, %v655
  %v657 = vpop.f32.mrb[0].mxu0
  %658 = vmatprep.mubr.bf16.mxu0 0
  %659 = vmatmul.mubr.bf16.gmra.mrb[0].mxu0 %v374
  %v660 = vpop.f32.mrb[0].mxu0
  %v661 = vadd.f32 0.0, %v660
  %v662 = vpop.f32.mrb[0].mxu0
  %v663 = vpop.f32.mrb[0].mxu0
  %v664 = vadd.f32 0.0, %v663
  %v665 = vpop.f32.mrb[0].mxu0
  %666 = vmatprep.mubr.bf16.mxu0 0
  %667 = vmatmul.mubr.bf16.gmra.mrb[0].mxu0 %v375
  %v668 = vpop.f32.mrb[0].mxu0
  %v669 = vadd.f32 0.0, %v668
  %v670 = vpop.f32.mrb[0].mxu0
  %v671 = vpop.f32.mrb[0].mxu0
  %v672 = vadd.f32 0.0, %v671
  %v673 = vpop.f32.mrb[0].mxu0
  %674 = vmatprep.mubr.bf16.mxu0 0
  %675 = vmatmul.mubr.bf16.gmra.mrb[0].mxu0 %v376
  %v676 = vpop.f32.mrb[0].mxu0
  %v677 = vadd.f32 0.0, %v676
  %v678 = vpop.f32.mrb[0].mxu0
  %v679 = vpop.f32.mrb[0].mxu0
  %v680 = vadd.f32 0.0, %v679
  %v681 = vpop.f32.mrb[0].mxu0
  %682 = vmatprep.mubr.bf16.mxu0 0
  %683 = vmatmul.mubr.bf16.gmra.mrb[0].mxu0 %v377
  %v684 = vpop.f32.mrb[0].mxu0
  %v685 = vadd.f32 0.0, %v684
  %v686 = vpop.f32.mrb[0].mxu0
  %v687 = vpop.f32.mrb[0].mxu0
  %v688 = vadd.f32 0.0, %v687
  %v689 = vpop.f32.mrb[0].mxu0
  %690 = vmatprep.mubr.bf16.mxu0 0
  %691 = vmatmul.mubr.bf16.gmra.mrb[0].mxu0 %v378
  %v692 = vpop.f32.mrb[0].mxu0
  %v693 = vadd.f32 0.0, %v692
  %v694 = vpop.f32.mrb[0].mxu0
  %v695 = vpop.f32.mrb[0].mxu0
  %v696 = vadd.f32 0.0, %v695
  %v697 = vpop.f32.mrb[0].mxu0
  %698 = vmatprep.mubr.bf16.mxu0 0
  %699 = vmatmul.mubr.bf16.gmra.mrb[0].mxu0 %v379
  %v700 = vpop.f32.mrb[0].mxu0
  %v701 = vadd.f32 0.0, %v700
  %v702 = vpop.f32.mrb[0].mxu0
  %v703 = vpop.f32.mrb[0].mxu0
  %v704 = vadd.f32 0.0, %v703
  %v705 = vpop.f32.mrb[0].mxu0
  %706 = vmatprep.mubr.bf16.mxu0 0
  %707 = vmatmul.mubr.bf16.gmra.mrb[0].mxu0 %v380
  %v708 = vpop.f32.mrb[0].mxu0
  %v709 = vadd.f32 0.0, %v708
  %v710 = vpop.f32.mrb[0].mxu0
  %v711 = vpop.f32.mrb[0].mxu0
  %v712 = vadd.f32 0.0, %v711
  %v713 = vpop.f32.mrb[0].mxu0
  %714 = vmatprep.mubr.bf16.mxu0 0
  %715 = vmatmul.mubr.bf16.gmra.mrb[0].mxu0 %v381
  %v716 = vpop.f32.mrb[0].mxu0
  %v717 = vadd.f32 0.0, %v716
  %v718 = vpop.f32.mrb[0].mxu0
  %v719 = vpop.f32.mrb[0].mxu0
  %v720 = vadd.f32 0.0, %v719
  %v721 = vpop.f32.mrb[0].mxu0
  %722 = vmatprep.mubr.bf16.mxu0 0
  %723 = vmatmul.mubr.bf16.gmra.mrb[0].mxu0 %v382
  %v724 = vpop.f32.mrb[0].mxu0
  %v725 = vadd.f32 0.0, %v724
  %v726 = vpop.f32.mrb[0].mxu0
  %v727 = vpop.f32.mrb[0].mxu0
  %v728 = vadd.f32 0.0, %v727
  %v729 = vpop.f32.mrb[0].mxu0
  %730 = vmatprep.mubr.bf16.mxu0 0
  %731 = vmatmul.mubr.bf16.gmra.mrb[0].mxu0 %v383
  %v732 = vpop.f32.mrb[0].mxu0
  %v733 = vadd.f32 0.0, %v732
  %v734 = vpop.f32.mrb[0].mxu0
  %v735 = vpop.f32.mrb[0].mxu0
  %v736 = vadd.f32 0.0, %v735
  %v737 = vpop.f32.mrb[0].mxu0
  %738 = vmatprep.mubr.bf16.mxu0 0
  %739 = vmatmul.mubr.bf16.gmra.mrb[0].mxu0 %v384
  %v740 = vpop.f32.mrb[0].mxu0
  %v741 = vadd.f32 0.0, %v740
  %v742 = vpop.f32.mrb[0].mxu0
  %v743 = vpop.f32.mrb[0].mxu0
  %v744 = vadd.f32 0.0, %v743
  %v745 = vpop.f32.mrb[0].mxu0
  %746 = vmatprep.mubr.bf16.mxu0 0
  %747 = vmatmul.mubr.bf16.gmra.mrb[0].mxu0 %v385
  %v748 = vpop.f32.mrb[0].mxu0
  %v749 = vadd.f32 0.0, %v748
  %v750 = vpop.f32.mrb[0].mxu0
  %v751 = vpop.f32.mrb[0].mxu0
  %v752 = vadd.f32 0.0, %v751
  %v753 = vpop.f32.mrb[0].mxu0
  %754 = vdwg.mxu0
  %v755 = vadd.f32 %v82, %v501
  %v756 = vadd.f32 %v83, %v504
  %v757 = vadd.f32 %v84, %v509
  %v758 = vadd.f32 %v85, %v512
  %v759 = vadd.f32 %v86, %v517
  %v760 = vadd.f32 %v87, %v520
  %v761 = vadd.f32 %v88, %v525
  %v762 = vadd.f32 %v89, %v528
  %v763 = vadd.f32 %v90, %v533
  %v764 = vadd.f32 %v91, %v536
  %v765 = vadd.f32 %v92, %v541
  %v766 = vadd.f32 %v93, %v544
  %v767 = vadd.f32 %v94, %v549
  %v768 = vadd.f32 %v95, %v552
  %v769 = vadd.f32 %v96, %v557
  %v770 = vadd.f32 %v97, %v560
  %v771 = vadd.f32 %v98, %v565
  %v772 = vadd.f32 %v99, %v568
  %v773 = vadd.f32 %v100, %v573
  %v774 = vadd.f32 %v101, %v576
  %v775 = vadd.f32 %v102, %v581
  %v776 = vadd.f32 %v103, %v584
  %v777 = vadd.f32 %v104, %v589
  %v778 = vadd.f32 %v105, %v592
  %v779 = vadd.f32 %v106, %v597
  %v780 = vadd.f32 %v107, %v600
  %v781 = vadd.f32 %v108, %v605
  %v782 = vadd.f32 %v109, %v608
  %v783 = vadd.f32 %v110, %v613
  %v784 = vadd.f32 %v111, %v616
  %v785 = vadd.f32 %v112, %v621
  %v786 = vadd.f32 %v113, %v624
  %v787 = vadd.f32 %v114, %v629
  %v788 = vadd.f32 %v115, %v632
  %v789 = vadd.f32 %v116, %v637
  %v790 = vadd.f32 %v117, %v640
  %v791 = vadd.f32 %v118, %v645
  %v792 = vadd.f32 %v119, %v648
  %v793 = vadd.f32 %v120, %v653
  %v794 = vadd.f32 %v121, %v656
  %v795 = vadd.f32 %v122, %v661
  %v796 = vadd.f32 %v123, %v664
  %v797 = vadd.f32 %v124, %v669
  %v798 = vadd.f32 %v125, %v672
  %v799 = vadd.f32 %v126, %v677
  %v800 = vadd.f32 %v127, %v680
  %v801 = vadd.f32 %v128, %v685
  %v802 = vadd.f32 %v129, %v688
  %v803 = vadd.f32 %v130, %v693
  %v804 = vadd.f32 %v131, %v696
  %v805 = vadd.f32 %v132, %v701
  %v806 = vadd.f32 %v133, %v704
  %v807 = vadd.f32 %v134, %v709
  %v808 = vadd.f32 %v135, %v712
  %v809 = vadd.f32 %v136, %v717
  %v810 = vadd.f32 %v137, %v720
  %v811 = vadd.f32 %v138, %v725
  %v812 = vadd.f32 %v139, %v728
  %v813 = vadd.f32 %v140, %v733
  %v814 = vadd.f32 %v141, %v736
  %v815 = vadd.f32 %v142, %v741
  %v816 = vadd.f32 %v143, %v744
  %v817 = vadd.f32 %v144, %v749
  %v818 = vadd.f32 %v145, %v752
  %819 = vst [vmem:[#allocation2] sm:$0xff] %v755
  %820 = vst [vmem:[#allocation2 + $0x8] sm:$0xff] %v756
  %821 = vst [vmem:[#allocation2 + $0x10] sm:$0xff] %v757
  %822 = vst [vmem:[#allocation2 + $0x18] sm:$0xff] %v758
  %823 = vst [vmem:[#allocation2 + $0x20] sm:$0xff] %v759
  %824 = vst [vmem:[#allocation2 + $0x28] sm:$0xff] %v760
  %825 = vst [vmem:[#allocation2 + $0x30] sm:$0xff] %v761
  %826 = vst [vmem:[#allocation2 + $0x38] sm:$0xff] %v762
  %827 = vst [vmem:[#allocation2 + $0x40] sm:$0xff] %v763
  %828 = vst [vmem:[#allocation2 + $0x48] sm:$0xff] %v764
  %829 = vst [vmem:[#allocation2 + $0x50] sm:$0xff] %v765
  %830 = vst [vmem:[#allocation2 + $0x58] sm:$0xff] %v766
  %831 = vst [vmem:[#allocation2 + $0x60] sm:$0xff] %v767
  %832 = vst [vmem:[#allocation2 + $0x68] sm:$0xff] %v768
  %833 = vst [vmem:[#allocation2 + $0x70] sm:$0xff] %v769
  %834 = vst [vmem:[#allocation2 + $0x78] sm:$0xff] %v770
  %835 = vst [vmem:[#allocation2 + $0x80] sm:$0xff] %v771
  %836 = vst [vmem:[#allocation2 + $0x88] sm:$0xff] %v772
  %837 = vst [vmem:[#allocation2 + $0x90] sm:$0xff] %v773
  %838 = vst [vmem:[#allocation2 + $0x98] sm:$0xff] %v774
  %839 = vst [vmem:[#allocation2 + $0xa0] sm:$0xff] %v775
  %840 = vst [vmem:[#allocation2 + $0xa8] sm:$0xff] %v776
  %841 = vst [vmem:[#allocation2 + $0xb0] sm:$0xff] %v777
  %842 = vst [vmem:[#allocation2 + $0xb8] sm:$0xff] %v778
  %843 = vst [vmem:[#allocation2 + $0xc0] sm:$0xff] %v779
  %844 = vst [vmem:[#allocation2 + $0xc8] sm:$0xff] %v780
  %845 = vst [vmem:[#allocation2 + $0xd0] sm:$0xff] %v781
  %846 = vst [vmem:[#allocation2 + $0xd8] sm:$0xff] %v782
  %847 = vst [vmem:[#allocation2 + $0xe0] sm:$0xff] %v783
  %848 = vst [vmem:[#allocation2 + $0xe8] sm:$0xff] %v784
  %849 = vst [vmem:[#allocation2 + $0xf0] sm:$0xff] %v785
  %850 = vst [vmem:[#allocation2 + $0xf8] sm:$0xff] %v786
  %851 = vst [vmem:[#allocation2 + $0x100] sm:$0xff] %v787
  %852 = vst [vmem:[#allocation2 + $0x108] sm:$0xff] %v788
  %853 = vst [vmem:[#allocation2 + $0x110] sm:$0xff] %v789
  %854 = vst [vmem:[#allocation2 + $0x118] sm:$0xff] %v790
  %855 = vst [vmem:[#allocation2 + $0x120] sm:$0xff] %v791
  %856 = vst [vmem:[#allocation2 + $0x128] sm:$0xff] %v792
  %857 = vst [vmem:[#allocation2 + $0x130] sm:$0xff] %v793
  %858 = vst [vmem:[#allocation2 + $0x138] sm:$0xff] %v794
  %859 = vst [vmem:[#allocation2 + $0x140] sm:$0xff] %v795
  %860 = vst [vmem:[#allocation2 + $0x148] sm:$0xff] %v796
  %861 = vst [vmem:[#allocation2 + $0x150] sm:$0xff] %v797
  %862 = vst [vmem:[#allocation2 + $0x158] sm:$0xff] %v798
  %863 = vst [vmem:[#allocation2 + $0x160] sm:$0xff] %v799
  %864 = vst [vmem:[#allocation2 + $0x168] sm:$0xff] %v800
  %865 = vst [vmem:[#allocation2 + $0x170] sm:$0xff] %v801
  %866 = vst [vmem:[#allocation2 + $0x178] sm:$0xff] %v802
  %867 = vst [vmem:[#allocation2 + $0x180] sm:$0xff] %v803
  %868 = vst [vmem:[#allocation2 + $0x188] sm:$0xff] %v804
  %869 = vst [vmem:[#allocation2 + $0x190] sm:$0xff] %v805
  %870 = vst [vmem:[#allocation2 + $0x198] sm:$0xff] %v806
  %871 = vst [vmem:[#allocation2 + $0x1a0] sm:$0xff] %v807
  %872 = vst [vmem:[#allocation2 + $0x1a8] sm:$0xff] %v808
  %873 = vst [vmem:[#allocation2 + $0x1b0] sm:$0xff] %v809
  %874 = vst [vmem:[#allocation2 + $0x1b8] sm:$0xff] %v810
  %875 = vst [vmem:[#allocation2 + $0x1c0] sm:$0xff] %v811
  %876 = vst [vmem:[#allocation2 + $0x1c8] sm:$0xff] %v812
  %877 = vst [vmem:[#allocation2 + $0x1d0] sm:$0xff] %v813
  %878 = vst [vmem:[#allocation2 + $0x1d8] sm:$0xff] %v814
  %879 = vst [vmem:[#allocation2 + $0x1e0] sm:$0xff] %v815
  %880 = vst [vmem:[#allocation2 + $0x1e8] sm:$0xff] %v816
  %881 = vst [vmem:[#allocation2 + $0x1f0] sm:$0xff] %v817
  %882 = vst [vmem:[#allocation2 + $0x1f8] sm:$0xff] %v818
  // Predicated region
  $region14: #{residual_block_forward.4} parent=0 // pred_check
    %p883 = pneg %p14
  $region15: #{residual_block_forward.4} parent=0 // pred_check_branch
    %885 = sbr.rel (%p883) target = $region17
  $region16: #{residual_block_forward.4} parent=0 // pred_region
    %v886 = vld [vmem:[#allocation2] sm:$0xff]
    %v887 = vld [vmem:[#allocation2 + $0x8] sm:$0xff]
    %v888 = vld [vmem:[#allocation2 + $0x10] sm:$0xff]
    %v889 = vld [vmem:[#allocation2 + $0x18] sm:$0xff]
    %v890 = vld [vmem:[#allocation2 + $0x20] sm:$0xff]
    %v891 = vld [vmem:[#allocation2 + $0x28] sm:$0xff]
    %v892 = vld [vmem:[#allocation2 + $0x30] sm:$0xff]
    %v893 = vld [vmem:[#allocation2 + $0x38] sm:$0xff]
    %v894 = vld [vmem:[#allocation2 + $0x40] sm:$0xff]
    %v895 = vld [vmem:[#allocation2 + $0x48] sm:$0xff]
    %v896 = vld [vmem:[#allocation2 + $0x50] sm:$0xff]
    %v897 = vld [vmem:[#allocation2 + $0x58] sm:$0xff]
    %v898 = vld [vmem:[#allocation2 + $0x60] sm:$0xff]
    %v899 = vld [vmem:[#allocation2 + $0x68] sm:$0xff]
    %v900 = vld [vmem:[#allocation2 + $0x70] sm:$0xff]
    %v901 = vld [vmem:[#allocation2 + $0x78] sm:$0xff]
    %v902 = vld [vmem:[#allocation2 + $0x80] sm:$0xff]
    %v903 = vld [vmem:[#allocation2 + $0x88] sm:$0xff]
    %v904 = vld [vmem:[#allocation2 + $0x90] sm:$0xff]
    %v905 = vld [vmem:[#allocation2 + $0x98] sm:$0xff]
    %v906 = vld [vmem:[#allocation2 + $0xa0] sm:$0xff]
    %v907 = vld [vmem:[#allocation2 + $0xa8] sm:$0xff]
    %v908 = vld [vmem:[#allocation2 + $0xb0] sm:$0xff]
    %v909 = vld [vmem:[#allocation2 + $0xb8] sm:$0xff]
    %v910 = vld [vmem:[#allocation2 + $0xc0] sm:$0xff]
    %v911 = vld [vmem:[#allocation2 + $0xc8] sm:$0xff]
    %v912 = vld [vmem:[#allocation2 + $0xd0] sm:$0xff]
    %v913 = vld [vmem:[#allocation2 + $0xd8] sm:$0xff]
    %v914 = vld [vmem:[#allocation2 + $0xe0] sm:$0xff]
    %v915 = vld [vmem:[#allocation2 + $0xe8] sm:$0xff]
    %v916 = vld [vmem:[#allocation2 + $0xf0] sm:$0xff]
    %v917 = vld [vmem:[#allocation2 + $0xf8] sm:$0xff]
    %v918 = vld [vmem:[#allocation2 + $0x100] sm:$0xff]
    %v919 = vld [vmem:[#allocation2 + $0x108] sm:$0xff]
    %v920 = vld [vmem:[#allocation2 + $0x110] sm:$0xff]
    %v921 = vld [vmem:[#allocation2 + $0x118] sm:$0xff]
    %v922 = vld [vmem:[#allocation2 + $0x120] sm:$0xff]
    %v923 = vld [vmem:[#allocation2 + $0x128] sm:$0xff]
    %v924 = vld [vmem:[#allocation2 + $0x130] sm:$0xff]
    %v925 = vld [vmem:[#allocation2 + $0x138] sm:$0xff]
    %v926 = vld [vmem:[#allocation2 + $0x140] sm:$0xff]
    %v927 = vld [vmem:[#allocation2 + $0x148] sm:$0xff]
    %v928 = vld [vmem:[#allocation2 + $0x150] sm:$0xff]
    %v929 = vld [vmem:[#allocation2 + $0x158] sm:$0xff]
    %v930 = vld [vmem:[#allocation2 + $0x160] sm:$0xff]
    %v931 = vld [vmem:[#allocation2 + $0x168] sm:$0xff]
    %v932 = vld [vmem:[#allocation2 + $0x170] sm:$0xff]
    %v933 = vld [vmem:[#allocation2 + $0x178] sm:$0xff]
    %v934 = vld [vmem:[#allocation2 + $0x180] sm:$0xff]
    %v935 = vld [vmem:[#allocation2 + $0x188] sm:$0xff]
    %v936 = vld [vmem:[#allocation2 + $0x190] sm:$0xff]
    %v937 = vld [vmem:[#allocation2 + $0x198] sm:$0xff]
    %v938 = vld [vmem:[#allocation2 + $0x1a0] sm:$0xff]
    %v939 = vld [vmem:[#allocation2 + $0x1a8] sm:$0xff]
    %v940 = vld [vmem:[#allocation2 + $0x1b0] sm:$0xff]
    %v941 = vld [vmem:[#allocation2 + $0x1b8] sm:$0xff]
    %v942 = vld [vmem:[#allocation2 + $0x1c0] sm:$0xff]
    %v943 = vld [vmem:[#allocation2 + $0x1c8] sm:$0xff]
    %v944 = vld [vmem:[#allocation2 + $0x1d0] sm:$0xff]
    %v945 = vld [vmem:[#allocation2 + $0x1d8] sm:$0xff]
    %v946 = vld [vmem:[#allocation2 + $0x1e0] sm:$0xff]
    %v947 = vld [vmem:[#allocation2 + $0x1e8] sm:$0xff]
    %v948 = vld [vmem:[#allocation2 + $0x1f0] sm:$0xff]
    %v949 = vld [vmem:[#allocation2 + $0x1f8] sm:$0xff]
    %950 = vst [vmem:[%s2] sm:$0xff] %v886
    %951 = vst [vmem:[%s2 + $0x8] sm:$0xff] %v887
    %952 = vst [vmem:[%s2 + $0x10] sm:$0xff] %v888
    %953 = vst [vmem:[%s2 + $0x18] sm:$0xff] %v889
    %954 = vst [vmem:[%s2 + $0x20] sm:$0xff] %v890
    %955 = vst [vmem:[%s2 + $0x28] sm:$0xff] %v891
    %956 = vst [vmem:[%s2 + $0x30] sm:$0xff] %v892
    %957 = vst [vmem:[%s2 + $0x38] sm:$0xff] %v893
    %958 = vst [vmem:[%s2 + $0x40] sm:$0xff] %v894
    %959 = vst [vmem:[%s2 + $0x48] sm:$0xff] %v895
    %960 = vst [vmem:[%s2 + $0x50] sm:$0xff] %v896
    %961 = vst [vmem:[%s2 + $0x58] sm:$0xff] %v897
    %962 = vst [vmem:[%s2 + $0x60] sm:$0xff] %v898
    %963 = vst [vmem:[%s2 + $0x68] sm:$0xff] %v899
    %964 = vst [vmem:[%s2 + $0x70] sm:$0xff] %v900
    %965 = vst [vmem:[%s2 + $0x78] sm:$0xff] %v901
    %966 = vst [vmem:[%s2 + $0x80] sm:$0xff] %v902
    %967 = vst [vmem:[%s2 + $0x88] sm:$0xff] %v903
    %968 = vst [vmem:[%s2 + $0x90] sm:$0xff] %v904
    %969 = vst [vmem:[%s2 + $0x98] sm:$0xff] %v905
    %970 = vst [vmem:[%s2 + $0xa0] sm:$0xff] %v906
    %971 = vst [vmem:[%s2 + $0xa8] sm:$0xff] %v907
    %972 = vst [vmem:[%s2 + $0xb0] sm:$0xff] %v908
    %973 = vst [vmem:[%s2 + $0xb8] sm:$0xff] %v909
    %974 = vst [vmem:[%s2 + $0xc0] sm:$0xff] %v910
    %975 = vst [vmem:[%s2 + $0xc8] sm:$0xff] %v911
    %976 = vst [vmem:[%s2 + $0xd0] sm:$0xff] %v912
    %977 = vst [vmem:[%s2 + $0xd8] sm:$0xff] %v913
    %978 = vst [vmem:[%s2 + $0xe0] sm:$0xff] %v914
    %979 = vst [vmem:[%s2 + $0xe8] sm:$0xff] %v915
    %980 = vst [vmem:[%s2 + $0xf0] sm:$0xff] %v916
    %981 = vst [vmem:[%s2 + $0xf8] sm:$0xff] %v917
    %982 = vst [vmem:[%s2 + $0x100] sm:$0xff] %v918
    %983 = vst [vmem:[%s2 + $0x108] sm:$0xff] %v919
    %984 = vst [vmem:[%s2 + $0x110] sm:$0xff] %v920
    %985 = vst [vmem:[%s2 + $0x118] sm:$0xff] %v921
    %986 = vst [vmem:[%s2 + $0x120] sm:$0xff] %v922
    %987 = vst [vmem:[%s2 + $0x128] sm:$0xff] %v923
    %988 = vst [vmem:[%s2 + $0x130] sm:$0xff] %v924
    %989 = vst [vmem:[%s2 + $0x138] sm:$0xff] %v925
    %990 = vst [vmem:[%s2 + $0x140] sm:$0xff] %v926
    %991 = vst [vmem:[%s2 + $0x148] sm:$0xff] %v927
    %992 = vst [vmem:[%s2 + $0x150] sm:$0xff] %v928
    %993 = vst [vmem:[%s2 + $0x158] sm:$0xff] %v929
    %994 = vst [vmem:[%s2 + $0x160] sm:$0xff] %v930
    %995 = vst [vmem:[%s2 + $0x168] sm:$0xff] %v931
    %996 = vst [vmem:[%s2 + $0x170] sm:$0xff] %v932
    %997 = vst [vmem:[%s2 + $0x178] sm:$0xff] %v933
    %998 = vst [vmem:[%s2 + $0x180] sm:$0xff] %v934
    %999 = vst [vmem:[%s2 + $0x188] sm:$0xff] %v935
    %1000 = vst [vmem:[%s2 + $0x190] sm:$0xff] %v936
    %1001 = vst [vmem:[%s2 + $0x198] sm:$0xff] %v937
    %1002 = vst [vmem:[%s2 + $0x1a0] sm:$0xff] %v938
    %1003 = vst [vmem:[%s2 + $0x1a8] sm:$0xff] %v939
    %1004 = vst [vmem:[%s2 + $0x1b0] sm:$0xff] %v940
    %1005 = vst [vmem:[%s2 + $0x1b8] sm:$0xff] %v941
    %1006 = vst [vmem:[%s2 + $0x1c0] sm:$0xff] %v942
    %1007 = vst [vmem:[%s2 + $0x1c8] sm:$0xff] %v943
    %1008 = vst [vmem:[%s2 + $0x1d0] sm:$0xff] %v944
    %1009 = vst [vmem:[%s2 + $0x1d8] sm:$0xff] %v945
    %1010 = vst [vmem:[%s2 + $0x1e0] sm:$0xff] %v946
    %1011 = vst [vmem:[%s2 + $0x1e8] sm:$0xff] %v947
    %1012 = vst [vmem:[%s2 + $0x1f0] sm:$0xff] %v948
    %1013 = vst [vmem:[%s2 + $0x1f8] sm:$0xff] %v949
    %v1014 = vadd.f32 %v886, %v887
    %v1015 = vadd.f32 %v1014, %v888
    %v1016 = vadd.f32 %v1015, %v889
    %v1017 = vadd.f32 %v1016, %v890
    %v1018 = vadd.f32 %v1017, %v891
    %v1019 = vadd.f32 %v1018, %v892
    %v1020 = vadd.f32 %v1019, %v893
    %v1021 = vadd.f32 %v1020, %v894
    %v1022 = vadd.f32 %v1021, %v895
    %v1023 = vadd.f32 %v1022, %v896
    %v1024 = vadd.f32 %v1023, %v897
    %v1025 = vadd.f32 %v1024, %v898
    %v1026 = vadd.f32 %v1025, %v899
    %v1027 = vadd.f32 %v1026, %v900
    %v1028 = vadd.f32 %v1027, %v901
    %v1029 = vadd.f32 %v1028, %v902
    %v1030 = vadd.f32 %v1029, %v903
    %v1031 = vadd.f32 %v1030, %v904
    %v1032 = vadd.f32 %v1031, %v905
    %v1033 = vadd.f32 %v1032, %v906
    %v1034 = vadd.f32 %v1033, %v907
    %v1035 = vadd.f32 %v1034, %v908
    %v1036 = vadd.f32 %v1035, %v909
    %v1037 = vadd.f32 %v1036, %v910
    %v1038 = vadd.f32 %v1037, %v911
    %v1039 = vadd.f32 %v1038, %v912
    %v1040 = vadd.f32 %v1039, %v913
    %v1041 = vadd.f32 %v1040, %v914
    %v1042 = vadd.f32 %v1041, %v915
    %v1043 = vadd.f32 %v1042, %v916
    %v1044 = vadd.f32 %v1043, %v917
    %v1045 = vadd.f32 %v1044, %v918
    %v1046 = vadd.f32 %v1045, %v919
    %v1047 = vadd.f32 %v1046, %v920
    %v1048 = vadd.f32 %v1047, %v921
    %v1049 = vadd.f32 %v1048, %v922
    %v1050 = vadd.f32 %v1049, %v923
    %v1051 = vadd.f32 %v1050, %v924
    %v1052 = vadd.f32 %v1051, %v925
    %v1053 = vadd.f32 %v1052, %v926
    %v1054 = vadd.f32 %v1053, %v927
    %v1055 = vadd.f32 %v1054, %v928
    %v1056 = vadd.f32 %v1055, %v929
    %v1057 = vadd.f32 %v1056, %v930
    %v1058 = vadd.f32 %v1057, %v931
    %v1059 = vadd.f32 %v1058, %v932
    %v1060 = vadd.f32 %v1059, %v933
    %v1061 = vadd.f32 %v1060, %v934
    %v1062 = vadd.f32 %v1061, %v935
    %v1063 = vadd.f32 %v1062, %v936
    %v1064 = vadd.f32 %v1063, %v937
    %v1065 = vadd.f32 %v1064, %v938
    %v1066 = vadd.f32 %v1065, %v939
    %v1067 = vadd.f32 %v1066, %v940
    %v1068 = vadd.f32 %v1067, %v941
    %v1069 = vadd.f32 %v1068, %v942
    %v1070 = vadd.f32 %v1069, %v943
    %v1071 = vadd.f32 %v1070, %v944
    %v1072 = vadd.f32 %v1071, %v945
    %v1073 = vadd.f32 %v1072, %v946
    %v1074 = vadd.f32 %v1073, %v947
    %v1075 = vadd.f32 %v1074, %v948
    %v1076 = vadd.f32 %v1075, %v949
    %v1077 = vrot.slane %v1076, 4
    %v1078 = vadd.f32 %v1076, %v1077
    %v1079 = vrot.slane %v1078, 2
    %v1080 = vadd.f32 %v1078, %v1079
    %v1081 = vrot.slane %v1080, 1
    %v1082 = vadd.f32 %v1080, %v1081
    %v1083 = vmul.f32 %v886, %v886
    %v1084 = vmul.f32 %v887, %v887
    %v1085 = vmul.f32 %v888, %v888
    %v1086 = vmul.f32 %v889, %v889
    %v1087 = vmul.f32 %v890, %v890
    %v1088 = vmul.f32 %v891, %v891
    %v1089 = vmul.f32 %v892, %v892
    %v1090 = vmul.f32 %v893, %v893
    %v1091 = vmul.f32 %v894, %v894
    %v1092 = vmul.f32 %v895, %v895
    %v1093 = vmul.f32 %v896, %v896
    %v1094 = vmul.f32 %v897, %v897
    %v1095 = vmul.f32 %v898, %v898
    %v1096 = vmul.f32 %v899, %v899
    %v1097 = vmul.f32 %v900, %v900
    %v1098 = vmul.f32 %v901, %v901
    %v1099 = vmul.f32 %v902, %v902
    %v1100 = vmul.f32 %v903, %v903
    %v1101 = vmul.f32 %v904, %v904
    %v1102 = vmul.f32 %v905, %v905
    %v1103 = vmul.f32 %v906, %v906
    %v1104 = vmul.f32 %v907, %v907
    %v1105 = vmul.f32 %v908, %v908
    %v1106 = vmul.f32 %v909, %v909
    %v1107 = vmul.f32 %v910, %v910
    %v1108 = vmul.f32 %v911, %v911
    %v1109 = vmul.f32 %v912, %v912
    %v1110 = vmul.f32 %v913, %v913
    %v1111 = vmul.f32 %v914, %v914
    %v1112 = vmul.f32 %v915, %v915
    %v1113 = vmul.f32 %v916, %v916
    %v1114 = vmul.f32 %v917, %v917
    %v1115 = vmul.f32 %v918, %v918
    %v1116 = vmul.f32 %v919, %v919
    %v1117 = vmul.f32 %v920, %v920
    %v1118 = vmul.f32 %v921, %v921
    %v1119 = vmul.f32 %v922, %v922
    %v1120 = vmul.f32 %v923, %v923
    %v1121 = vmul.f32 %v924, %v924
    %v1122 = vmul.f32 %v925, %v925
    %v1123 = vmul.f32 %v926, %v926
    %v1124 = vmul.f32 %v927, %v927
    %v1125 = vmul.f32 %v928, %v928
    %v1126 = vmul.f32 %v929, %v929
    %v1127 = vmul.f32 %v930, %v930
    %v1128 = vmul.f32 %v931, %v931
    %v1129 = vmul.f32 %v932, %v932
    %v1130 = vmul.f32 %v933, %v933
    %v1131 = vmul.f32 %v934, %v934
    %v1132 = vmul.f32 %v935, %v935
    %v1133 = vmul.f32 %v936, %v936
    %v1134 = vmul.f32 %v937, %v937
    %v1135 = vmul.f32 %v938, %v938
    %v1136 = vmul.f32 %v939, %v939
    %v1137 = vmul.f32 %v940, %v940
    %v1138 = vmul.f32 %v941, %v941
    %v1139 = vmul.f32 %v942, %v942
    %v1140 = vmul.f32 %v943, %v943
    %v1141 = vmul.f32 %v944, %v944
    %v1142 = vmul.f32 %v945, %v945
    %v1143 = vmul.f32 %v946, %v946
    %v1144 = vmul.f32 %v947, %v947
    %v1145 = vmul.f32 %v948, %v948
    %v1146 = vmul.f32 %v949, %v949
    %v1147 = vadd.f32 %v1083, %v1084
    %v1148 = vadd.f32 %v1147, %v1085
    %v1149 = vadd.f32 %v1148, %v1086
    %v1150 = vadd.f32 %v1149, %v1087
    %v1151 = vadd.f32 %v1150, %v1088
    %v1152 = vadd.f32 %v1151, %v1089
    %v1153 = vadd.f32 %v1152, %v1090
    %v1154 = vadd.f32 %v1153, %v1091
    %v1155 = vadd.f32 %v1154, %v1092
    %v1156 = vadd.f32 %v1155, %v1093
    %v1157 = vadd.f32 %v1156, %v1094
    %v1158 = vadd.f32 %v1157, %v1095
    %v1159 = vadd.f32 %v1158, %v1096
    %v1160 = vadd.f32 %v1159, %v1097
    %v1161 = vadd.f32 %v1160, %v1098
    %v1162 = vadd.f32 %v1161, %v1099
    %v1163 = vadd.f32 %v1162, %v1100
    %v1164 = vadd.f32 %v1163, %v1101
    %v1165 = vadd.f32 %v1164, %v1102
    %v1166 = vadd.f32 %v1165, %v1103
    %v1167 = vadd.f32 %v1166, %v1104
    %v1168 = vadd.f32 %v1167, %v1105
    %v1169 = vadd.f32 %v1168, %v1106
    %v1170 = vadd.f32 %v1169, %v1107
    %v1171 = vadd.f32 %v1170, %v1108
    %v1172 = vadd.f32 %v1171, %v1109
    %v1173 = vadd.f32 %v1172, %v1110
    %v1174 = vadd.f32 %v1173, %v1111
    %v1175 = vadd.f32 %v1174, %v1112
    %v1176 = vadd.f32 %v1175, %v1113
    %v1177 = vadd.f32 %v1176, %v1114
    %v1178 = vadd.f32 %v1177, %v1115
    %v1179 = vadd.f32 %v1178, %v1116
    %v1180 = vadd.f32 %v1179, %v1117
    %v1181 = vadd.f32 %v1180, %v1118
    %v1182 = vadd.f32 %v1181, %v1119
    %v1183 = vadd.f32 %v1182, %v1120
    %v1184 = vadd.f32 %v1183, %v1121
    %v1185 = vadd.f32 %v1184, %v1122
    %v1186 = vadd.f32 %v1185, %v1123
    %v1187 = vadd.f32 %v1186, %v1124
    %v1188 = vadd.f32 %v1187, %v1125
    %v1189 = vadd.f32 %v1188, %v1126
    %v1190 = vadd.f32 %v1189, %v1127
    %v1191 = vadd.f32 %v1190, %v1128
    %v1192 = vadd.f32 %v1191, %v1129
    %v1193 = vadd.f32 %v1192, %v1130
    %v1194 = vadd.f32 %v1193, %v1131
    %v1195 = vadd.f32 %v1194, %v1132
    %v1196 = vadd.f32 %v1195, %v1133
    %v1197 = vadd.f32 %v1196, %v1134
    %v1198 = vadd.f32 %v1197, %v1135
    %v1199 = vadd.f32 %v1198, %v1136
    %v1200 = vadd.f32 %v1199, %v1137
    %v1201 = vadd.f32 %v1200, %v1138
    %v1202 = vadd.f32 %v1201, %v1139
    %v1203 = vadd.f32 %v1202, %v1140
    %v1204 = vadd.f32 %v1203, %v1141
    %v1205 = vadd.f32 %v1204, %v1142
    %v1206 = vadd.f32 %v1205, %v1143
    %v1207 = vadd.f32 %v1206, %v1144
    %v1208 = vadd.f32 %v1207, %v1145
    %v1209 = vadd.f32 %v1208, %v1146
    %v1210 = vrot.slane %v1209, 4
    %v1211 = vadd.f32 %v1209, %v1210
    %v1212 = vrot.slane %v1211, 2
    %v1213 = vadd.f32 %v1211, %v1212
    %v1214 = vrot.slane %v1213, 1
    %v1215 = vadd.f32 %v1213, %v1214
    %v1216 = vlaneseq
    %v1217 = vshrl.u32 %v1216, 7
    %vm1218 = vcmp.eq.s32.totalorder %v1217, 0
    %vm1219 = vcmp.eq.s32.totalorder %v1217, 1
    %v1220 = vsel %vm1219, %v1215, 0.0
    %v1221 = vsel %vm1218, %v1082, %v1220
    %1222 = vst [vmem:[%s3] sm:$0xff] %v1221
  $region17: #{residual_block_forward.4} parent=0 // pred_fallthru
    _
  // Predicated region
  $region18: #{residual_block_forward.4} parent=0 // pred_check
    _
  $region19: #{residual_block_forward.4} parent=0 // pred_check_branch
    %1224 = sbr.rel (0) target = $region21
  $region20: #{residual_block_forward.4} parent=0 // pred_region
    _
  $region21: #{residual_block_forward.4} parent=0 // pred_fallthru
    _
  // Predicated region
  $region22: #{residual_block_forward.4} parent=0 // pred_check
    _
  $region23: #{residual_block_forward.4} parent=0 // pred_check_branch
    %1226 = sbr.rel (0) target = $region25
  $region24: #{residual_block_forward.4} parent=0 // pred_region
    _
  $region25: #{residual_block_forward.4} parent=0 // pred_fallthru
    _
  // Predicated region
  $region26: #{residual_block_forward.4} parent=0 // pred_check
    _
  $region27: #{residual_block_forward.4} parent=0 // pred_check_branch
    %1228 = sbr.rel (0) target = $region29
  $region28: #{residual_block_forward.4} parent=0 // pred_region
    _
  $region29: #{residual_block_forward.4} parent=0 // pred_fallthru
    _
  // Predicated region
  $region30: #{residual_block_forward.4} parent=0 // pred_check
    _
  $region31: #{residual_block_forward.4} parent=0 // pred_check_branch
    %1230 = sbr.rel (0) target = $region33
  $region32: #{residual_block_forward.4} parent=0 // pred_region
    _
  $region33: #{residual_block_forward.4} parent=0 // pred_fallthru
    _

// kernel: residual_block_forward.7
$region0: #{residual_block_forward.7}
  #allocation0 [shape = 'u32[]', space=smem, size = 0x4, offset = 0x4, fixed_abs, tag = 'smem constant byte address 0x4 - core index']
  #allocation1 [shape = 'u32[144,128]{1,0:T(1,128)}', space=vmem, size = 0x12000, scoped, tag = 'internal scratch']
  %s0 = inlined_call_operand.vmem [shape: f32[512,128], index: 0, kind: input, shape index: {}]
  %s1 = inlined_call_operand.vmem [shape: f32[1,128], index: 1, kind: input, shape index: {}]
  %s2 = inlined_call_operand.vmem [shape: f32[1,128], index: 2, kind: input, shape index: {}]
  %s3 = inlined_call_operand.vmem [shape: f32[512,128], index: 3, kind: output, shape index: {}]
  %s4 = sld [smem:[#allocation0]]
  $region22: #{residual_block_forward.7} parent=0
    _
  %s6 = ssub.s32 1, %s4
  %s7 = scalar_select 0, %s6, %s4
  // Predicated region
  $region2: #{residual_block_forward.7} parent=0 // pred_check
    _
  $region3: #{residual_block_forward.7} parent=0 // pred_check_branch
    %9 = sbr.rel (0) target = $region5
  $region4: #{residual_block_forward.7} parent=0 // pred_region
    _
  $region5: #{residual_block_forward.7} parent=0 // pred_fallthru
    _
  // Predicated region
  $region6: #{residual_block_forward.7} parent=0 // pred_check
    _
  $region7: #{residual_block_forward.7} parent=0 // pred_check_branch
    %11 = sbr.rel (0) target = $region9
  $region8: #{residual_block_forward.7} parent=0 // pred_region
    _
  $region9: #{residual_block_forward.7} parent=0 // pred_fallthru
    _
  // Predicated region
  $region10: #{residual_block_forward.7} parent=0 // pred_check
    _
  $region11: #{residual_block_forward.7} parent=0 // pred_check_branch
    %13 = sbr.rel (0) target = $region13
  $region12: #{residual_block_forward.7} parent=0 // pred_region
    _
  $region13: #{residual_block_forward.7} parent=0 // pred_fallthru
    _
  %v14 = vld [vmem:[%s0] sm:$0xff]
  %v15 = vld [vmem:[%s0 + $0x8] sm:$0xff]
  %v16 = vld [vmem:[%s0 + $0x10] sm:$0xff]
  %v17 = vld [vmem:[%s0 + $0x18] sm:$0xff]
  %v18 = vld [vmem:[%s0 + $0x20] sm:$0xff]
  %v19 = vld [vmem:[%s0 + $0x28] sm:$0xff]
  %v20 = vld [vmem:[%s0 + $0x30] sm:$0xff]
  %v21 = vld [vmem:[%s0 + $0x38] sm:$0xff]
  %v22 = vld [vmem:[%s0 + $0x40] sm:$0xff]
  %v23 = vld [vmem:[%s0 + $0x48] sm:$0xff]
  %v24 = vld [vmem:[%s0 + $0x50] sm:$0xff]
  %v25 = vld [vmem:[%s0 + $0x58] sm:$0xff]
  %v26 = vld [vmem:[%s0 + $0x60] sm:$0xff]
  %v27 = vld [vmem:[%s0 + $0x68] sm:$0xff]
  %v28 = vld [vmem:[%s0 + $0x70] sm:$0xff]
  %v29 = vld [vmem:[%s0 + $0x78] sm:$0xff]
  %v30 = vld [vmem:[%s0 + $0x80] sm:$0xff]
  %v31 = vld [vmem:[%s0 + $0x88] sm:$0xff]
  %v32 = vld [vmem:[%s0 + $0x90] sm:$0xff]
  %v33 = vld [vmem:[%s0 + $0x98] sm:$0xff]
  %v34 = vld [vmem:[%s0 + $0xa0] sm:$0xff]
  %v35 = vld [vmem:[%s0 + $0xa8] sm:$0xff]
  %v36 = vld [vmem:[%s0 + $0xb0] sm:$0xff]
  %v37 = vld [vmem:[%s0 + $0xb8] sm:$0xff]
  %v38 = vld [vmem:[%s0 + $0xc0] sm:$0xff]
  %v39 = vld [vmem:[%s0 + $0xc8] sm:$0xff]
  %v40 = vld [vmem:[%s0 + $0xd0] sm:$0xff]
  %v41 = vld [vmem:[%s0 + $0xd8] sm:$0xff]
  %v42 = vld [vmem:[%s0 + $0xe0] sm:$0xff]
  %v43 = vld [vmem:[%s0 + $0xe8] sm:$0xff]
  %v44 = vld [vmem:[%s0 + $0xf0] sm:$0xff]
  %v45 = vld [vmem:[%s0 + $0xf8] sm:$0xff]
  %v46 = vld [vmem:[%s0 + $0x100] sm:$0xff]
  %v47 = vld [vmem:[%s0 + $0x108] sm:$0xff]
  %v48 = vld [vmem:[%s0 + $0x110] sm:$0xff]
  %v49 = vld [vmem:[%s0 + $0x118] sm:$0xff]
  %v50 = vld [vmem:[%s0 + $0x120] sm:$0xff]
  %v51 = vld [vmem:[%s0 + $0x128] sm:$0xff]
  %v52 = vld [vmem:[%s0 + $0x130] sm:$0xff]
  %v53 = vld [vmem:[%s0 + $0x138] sm:$0xff]
  %v54 = vld [vmem:[%s0 + $0x140] sm:$0xff]
  %v55 = vld [vmem:[%s0 + $0x148] sm:$0xff]
  %v56 = vld [vmem:[%s0 + $0x150] sm:$0xff]
  %v57 = vld [vmem:[%s0 + $0x158] sm:$0xff]
  %v58 = vld [vmem:[%s0 + $0x160] sm:$0xff]
  %v59 = vld [vmem:[%s0 + $0x168] sm:$0xff]
  %v60 = vld [vmem:[%s0 + $0x170] sm:$0xff]
  %v61 = vld [vmem:[%s0 + $0x178] sm:$0xff]
  %v62 = vld [vmem:[%s0 + $0x180] sm:$0xff]
  %v63 = vld [vmem:[%s0 + $0x188] sm:$0xff]
  %v64 = vld [vmem:[%s0 + $0x190] sm:$0xff]
  %v65 = vld [vmem:[%s0 + $0x198] sm:$0xff]
  %v66 = vld [vmem:[%s0 + $0x1a0] sm:$0xff]
  %v67 = vld [vmem:[%s0 + $0x1a8] sm:$0xff]
  %v68 = vld [vmem:[%s0 + $0x1b0] sm:$0xff]
  %v69 = vld [vmem:[%s0 + $0x1b8] sm:$0xff]
  %v70 = vld [vmem:[%s0 + $0x1c0] sm:$0xff]
  %v71 = vld [vmem:[%s0 + $0x1c8] sm:$0xff]
  %v72 = vld [vmem:[%s0 + $0x1d0] sm:$0xff]
  %v73 = vld [vmem:[%s0 + $0x1d8] sm:$0xff]
  %v74 = vld [vmem:[%s0 + $0x1e0] sm:$0xff]
  %v75 = vld [vmem:[%s0 + $0x1e8] sm:$0xff]
  %v76 = vld [vmem:[%s0 + $0x1f0] sm:$0xff]
  %v77 = vld [vmem:[%s0 + $0x1f8] sm:$0xff]
  %v78 = vld [vmem:[%s1] sm:$0x1]
  %v80 = vlaneseq
  %v81 = vshrl.u32 %v80, 7
  %v82 = vsub.s32 0, %v81
  %v83 = vrot.slane %v78, %v82
  %v85 = vmul.f32 %v14, %v83
  %v86 = vmul.f32 %v15, %v83
  %v87 = vmul.f32 %v16, %v83
  %v88 = vmul.f32 %v17, %v83
  %v89 = vmul.f32 %v18, %v83
  %v90 = vmul.f32 %v19, %v83
  %v91 = vmul.f32 %v20, %v83
  %v92 = vmul.f32 %v21, %v83
  %v93 = vmul.f32 %v22, %v83
  %v94 = vmul.f32 %v23, %v83
  %v95 = vmul.f32 %v24, %v83
  %v96 = vmul.f32 %v25, %v83
  %v97 = vmul.f32 %v26, %v83
  %v98 = vmul.f32 %v27, %v83
  %v99 = vmul.f32 %v28, %v83
  %v100 = vmul.f32 %v29, %v83
  %v101 = vmul.f32 %v30, %v83
  %v102 = vmul.f32 %v31, %v83
  %v103 = vmul.f32 %v32, %v83
  %v104 = vmul.f32 %v33, %v83
  %v105 = vmul.f32 %v34, %v83
  %v106 = vmul.f32 %v35, %v83
  %v107 = vmul.f32 %v36, %v83
  %v108 = vmul.f32 %v37, %v83
  %v109 = vmul.f32 %v38, %v83
  %v110 = vmul.f32 %v39, %v83
  %v111 = vmul.f32 %v40, %v83
  %v112 = vmul.f32 %v41, %v83
  %v113 = vmul.f32 %v42, %v83
  %v114 = vmul.f32 %v43, %v83
  %v115 = vmul.f32 %v44, %v83
  %v116 = vmul.f32 %v45, %v83
  %v117 = vmul.f32 %v46, %v83
  %v118 = vmul.f32 %v47, %v83
  %v119 = vmul.f32 %v48, %v83
  %v120 = vmul.f32 %v49, %v83
  %v121 = vmul.f32 %v50, %v83
  %v122 = vmul.f32 %v51, %v83
  %v123 = vmul.f32 %v52, %v83
  %v124 = vmul.f32 %v53, %v83
  %v125 = vmul.f32 %v54, %v83
  %v126 = vmul.f32 %v55, %v83
  %v127 = vmul.f32 %v56, %v83
  %v128 = vmul.f32 %v57, %v83
  %v129 = vmul.f32 %v58, %v83
  %v130 = vmul.f32 %v59, %v83
  %v131 = vmul.f32 %v60, %v83
  %v132 = vmul.f32 %v61, %v83
  %v133 = vmul.f32 %v62, %v83
  %v134 = vmul.f32 %v63, %v83
  %v135 = vmul.f32 %v64, %v83
  %v136 = vmul.f32 %v65, %v83
  %v137 = vmul.f32 %v66, %v83
  %v138 = vmul.f32 %v67, %v83
  %v139 = vmul.f32 %v68, %v83
  %v140 = vmul.f32 %v69, %v83
  %v141 = vmul.f32 %v70, %v83
  %v142 = vmul.f32 %v71, %v83
  %v143 = vmul.f32 %v72, %v83
  %v144 = vmul.f32 %v73, %v83
  %v145 = vmul.f32 %v74, %v83
  %v146 = vmul.f32 %v75, %v83
  %v147 = vmul.f32 %v76, %v83
  %v148 = vmul.f32 %v77, %v83
  %v149 = vld [vmem:[%s2] sm:$0x1]
  %v151 = vlaneseq
  %v152 = vshrl.u32 %v151, 7
  %v153 = vsub.s32 0, %v152
  %v154 = vrot.slane %v149, %v153
  %v156 = vadd.f32 %v85, %v154
  %v157 = vadd.f32 %v86, %v154
  %v158 = vadd.f32 %v87, %v154
  %v159 = vadd.f32 %v88, %v154
  %v160 = vadd.f32 %v89, %v154
  %v161 = vadd.f32 %v90, %v154
  %v162 = vadd.f32 %v91, %v154
  %v163 = vadd.f32 %v92, %v154
  %v164 = vadd.f32 %v93, %v154
  %v165 = vadd.f32 %v94, %v154
  %v166 = vadd.f32 %v95, %v154
  %v167 = vadd.f32 %v96, %v154
  %v168 = vadd.f32 %v97, %v154
  %v169 = vadd.f32 %v98, %v154
  %v170 = vadd.f32 %v99, %v154
  %v171 = vadd.f32 %v100, %v154
  %v172 = vadd.f32 %v101, %v154
  %v173 = vadd.f32 %v102, %v154
  %v174 = vadd.f32 %v103, %v154
  %v175 = vadd.f32 %v104, %v154
  %v176 = vadd.f32 %v105, %v154
  %v177 = vadd.f32 %v106, %v154
  %v178 = vadd.f32 %v107, %v154
  %v179 = vadd.f32 %v108, %v154
  %v180 = vadd.f32 %v109, %v154
  %v181 = vadd.f32 %v110, %v154
  %v182 = vadd.f32 %v111, %v154
  %v183 = vadd.f32 %v112, %v154
  %v184 = vadd.f32 %v113, %v154
  %v185 = vadd.f32 %v114, %v154
  %v186 = vadd.f32 %v115, %v154
  %v187 = vadd.f32 %v116, %v154
  %v188 = vadd.f32 %v117, %v154
  %v189 = vadd.f32 %v118, %v154
  %v190 = vadd.f32 %v119, %v154
  %v191 = vadd.f32 %v120, %v154
  %v192 = vadd.f32 %v121, %v154
  %v193 = vadd.f32 %v122, %v154
  %v194 = vadd.f32 %v123, %v154
  %v195 = vadd.f32 %v124, %v154
  %v196 = vadd.f32 %v125, %v154
  %v197 = vadd.f32 %v126, %v154
  %v198 = vadd.f32 %v127, %v154
  %v199 = vadd.f32 %v128, %v154
  %v200 = vadd.f32 %v129, %v154
  %v201 = vadd.f32 %v130, %v154
  %v202 = vadd.f32 %v131, %v154
  %v203 = vadd.f32 %v132, %v154
  %v204 = vadd.f32 %v133, %v154
  %v205 = vadd.f32 %v134, %v154
  %v206 = vadd.f32 %v135, %v154
  %v207 = vadd.f32 %v136, %v154
  %v208 = vadd.f32 %v137, %v154
  %v209 = vadd.f32 %v138, %v154
  %v210 = vadd.f32 %v139, %v154
  %v211 = vadd.f32 %v140, %v154
  %v212 = vadd.f32 %v141, %v154
  %v213 = vadd.f32 %v142, %v154
  %v214 = vadd.f32 %v143, %v154
  %v215 = vadd.f32 %v144, %v154
  %v216 = vadd.f32 %v145, %v154
  %v217 = vadd.f32 %v146, %v154
  %v218 = vadd.f32 %v147, %v154
  %v219 = vadd.f32 %v148, %v154
  %220 = vst [vmem:[%s3] sm:$0xff] %v156
  %221 = vst [vmem:[%s3 + $0x8] sm:$0xff] %v157
  %222 = vst [vmem:[%s3 + $0x10] sm:$0xff] %v158
  %223 = vst [vmem:[%s3 + $0x18] sm:$0xff] %v159
  %224 = vst [vmem:[%s3 + $0x20] sm:$0xff] %v160
  %225 = vst [vmem:[%s3 + $0x28] sm:$0xff] %v161
  %226 = vst [vmem:[%s3 + $0x30] sm:$0xff] %v162
  %227 = vst [vmem:[%s3 + $0x38] sm:$0xff] %v163
  %228 = vst [vmem:[%s3 + $0x40] sm:$0xff] %v164
  %229 = vst [vmem:[%s3 + $0x48] sm:$0xff] %v165
  %230 = vst [vmem:[%s3 + $0x50] sm:$0xff] %v166
  %231 = vst [vmem:[%s3 + $0x58] sm:$0xff] %v167
  %232 = vst [vmem:[%s3 + $0x60] sm:$0xff] %v168
  %233 = vst [vmem:[%s3 + $0x68] sm:$0xff] %v169
  %234 = vst [vmem:[%s3 + $0x70] sm:$0xff] %v170
  %235 = vst [vmem:[%s3 + $0x78] sm:$0xff] %v171
  %236 = vst [vmem:[%s3 + $0x80] sm:$0xff] %v172
  %237 = vst [vmem:[%s3 + $0x88] sm:$0xff] %v173
  %238 = vst [vmem:[%s3 + $0x90] sm:$0xff] %v174
  %239 = vst [vmem:[%s3 + $0x98] sm:$0xff] %v175
  %240 = vst [vmem:[%s3 + $0xa0] sm:$0xff] %v176
  %241 = vst [vmem:[%s3 + $0xa8] sm:$0xff] %v177
  %242 = vst [vmem:[%s3 + $0xb0] sm:$0xff] %v178
  %243 = vst [vmem:[%s3 + $0xb8] sm:$0xff] %v179
  %244 = vst [vmem:[%s3 + $0xc0] sm:$0xff] %v180
  %245 = vst [vmem:[%s3 + $0xc8] sm:$0xff] %v181
  %246 = vst [vmem:[%s3 + $0xd0] sm:$0xff] %v182
  %247 = vst [vmem:[%s3 + $0xd8] sm:$0xff] %v183
  %248 = vst [vmem:[%s3 + $0xe0] sm:$0xff] %v184
  %249 = vst [vmem:[%s3 + $0xe8] sm:$0xff] %v185
  %250 = vst [vmem:[%s3 + $0xf0] sm:$0xff] %v186
  %251 = vst [vmem:[%s3 + $0xf8] sm:$0xff] %v187
  %252 = vst [vmem:[%s3 + $0x100] sm:$0xff] %v188
  %253 = vst [vmem:[%s3 + $0x108] sm:$0xff] %v189
  %254 = vst [vmem:[%s3 + $0x110] sm:$0xff] %v190
  %255 = vst [vmem:[%s3 + $0x118] sm:$0xff] %v191
  %256 = vst [vmem:[%s3 + $0x120] sm:$0xff] %v192
  %257 = vst [vmem:[%s3 + $0x128] sm:$0xff] %v193
  %258 = vst [vmem:[%s3 + $0x130] sm:$0xff] %v194
  %259 = vst [vmem:[%s3 + $0x138] sm:$0xff] %v195
  %260 = vst [vmem:[%s3 + $0x140] sm:$0xff] %v196
  %261 = vst [vmem:[%s3 + $0x148] sm:$0xff] %v197
  %262 = vst [vmem:[%s3 + $0x150] sm:$0xff] %v198
  %263 = vst [vmem:[%s3 + $0x158] sm:$0xff] %v199
  %264 = vst [vmem:[%s3 + $0x160] sm:$0xff] %v200
  %265 = vst [vmem:[%s3 + $0x168] sm:$0xff] %v201
  %266 = vst [vmem:[%s3 + $0x170] sm:$0xff] %v202
  %267 = vst [vmem:[%s3 + $0x178] sm:$0xff] %v203
  %268 = vst [vmem:[%s3 + $0x180] sm:$0xff] %v204
  %269 = vst [vmem:[%s3 + $0x188] sm:$0xff] %v205
  %270 = vst [vmem:[%s3 + $0x190] sm:$0xff] %v206
  %271 = vst [vmem:[%s3 + $0x198] sm:$0xff] %v207
  %272 = vst [vmem:[%s3 + $0x1a0] sm:$0xff] %v208
  %273 = vst [vmem:[%s3 + $0x1a8] sm:$0xff] %v209
  %274 = vst [vmem:[%s3 + $0x1b0] sm:$0xff] %v210
  %275 = vst [vmem:[%s3 + $0x1b8] sm:$0xff] %v211
  %276 = vst [vmem:[%s3 + $0x1c0] sm:$0xff] %v212
  %277 = vst [vmem:[%s3 + $0x1c8] sm:$0xff] %v213
  %278 = vst [vmem:[%s3 + $0x1d0] sm:$0xff] %v214
  %279 = vst [vmem:[%s3 + $0x1d8] sm:$0xff] %v215
  %280 = vst [vmem:[%s3 + $0x1e0] sm:$0xff] %v216
  %281 = vst [vmem:[%s3 + $0x1e8] sm:$0xff] %v217
  %282 = vst [vmem:[%s3 + $0x1f0] sm:$0xff] %v218
  %283 = vst [vmem:[%s3 + $0x1f8] sm:$0xff] %v219
  // Predicated region
  $region14: #{residual_block_forward.7} parent=0 // pred_check
    _
  $region15: #{residual_block_forward.7} parent=0 // pred_check_branch
    %285 = sbr.rel (0) target = $region17
  $region16: #{residual_block_forward.7} parent=0 // pred_region
    _
  $region17: #{residual_block_forward.7} parent=0 // pred_fallthru
    _
  // Predicated region
  $region18: #{residual_block_forward.7} parent=0 // pred_check
    _
  $region19: #{residual_block_forward.7} parent=0 // pred_check_branch
    %287 = sbr.rel (0) target = $region21
  $region20: #{residual_block_forward.7} parent=0 // pred_region
    _
  $region21: #{residual_block_forward.7} parent=0 // pred_fallthru
    _

</llo_original>
